<compile_context>
chip_gen: v5e
topology: v5e:2x2
jax: 0.10.0
libtpu: 0.0.40
codegen_flags: <defaults>
</compile_context>

<pallas_src>
import functools

import jax
import jax.numpy as jnp
from jax.experimental import pallas as pl
from jax.experimental.pallas import tpu as pltpu


def _round_up(x, m):
    return (x + m - 1) // m * m


def _pad_gates(w, h, h_pad):
    """Pad the trailing (3*h) gate dim to (3*h_pad), zero-padding each gate.

    Keeps the PyTorch [r | z | n] gate order but places each gate at a
    128-aligned lane offset so in-kernel gate slices are zero-cost views.
    """
    if h_pad == h:
        return w
    lead = w.shape[:-1]
    w = w.reshape(lead + (3, h))
    w = jnp.pad(w, [(0, 0)] * len(lead) + [(0, 0), (0, h_pad - h)])
    return w.reshape(lead + (3 * h_pad,))


def _gru_recurrence_kernel(gi_ref, whh_ref, bhh_ref, y_ref, h_scr, *,
                           hidden_pad, t_block):
    """One grid step: T_BLOCK timesteps of the GRU recurrence for one batch block.

    gi_ref : (T_BLOCK, B_BLK, 3*H_PAD)  precomputed x @ W_ih^T + b_ih
    whh_ref: (H_PAD, 3*H_PAD)
    bhh_ref: (1, 3*H_PAD)
    y_ref  : (T_BLOCK, B_BLK, H_PAD)
    h_scr  : (B_BLK, H_PAD) f32 hidden-state carry across seq chunks
    """
    @pl.when(pl.program_id(1) == 0)
    def _():
        h_scr[...] = jnp.zeros_like(h_scr)

    Hp = hidden_pad
    whh = whh_ref[...]            # resident recurrent weight, loaded once per chunk
    bhh = bhh_ref[0]

    def step(t, h):
        gi = gi_ref[t]            # (B_BLK, 3*H_PAD), gates at 128-aligned offsets
        gh = jnp.dot(h, whh, preferred_element_type=jnp.float32) + bhh
        r = jax.nn.sigmoid(gi[:, 0:Hp] + gh[:, 0:Hp])
        z = jax.nn.sigmoid(gi[:, Hp:2 * Hp] + gh[:, Hp:2 * Hp])
        n = jnp.tanh(gi[:, 2 * Hp:3 * Hp] + r * gh[:, 2 * Hp:3 * Hp])
        h_new = (1.0 - z) * n + z * h
        y_ref[t] = h_new.astype(y_ref.dtype)
        return h_new

    h_scr[...] = jax.lax.fori_loop(0, t_block, step, h_scr[...], unroll=True)


def gru_recurrence_pallas(gi_seq, w_hh_p, b_hh_p, *, hidden_pad, t_block, b_block):
    """Recurrent part of one GRU layer.

    gi_seq: (S_PAD, B_PAD, 3*H_PAD) seq-major precomputed input projections.
    Returns y: (S_PAD, B_PAD, H_PAD) hidden state at every timestep.
    """
    s_pad, b_pad, g = gi_seq.shape
    grid = (b_pad // b_block, s_pad // t_block)
    kernel = functools.partial(_gru_recurrence_kernel,
                               hidden_pad=hidden_pad, t_block=t_block)
    return pl.pallas_call(
        kernel,
        grid=grid,
        in_specs=[
            pl.BlockSpec((t_block, b_block, g), lambda b, t: (t, b, 0)),
            pl.BlockSpec((hidden_pad, g), lambda b, t: (0, 0)),
            pl.BlockSpec((1, g), lambda b, t: (0, 0)),
        ],
        out_specs=pl.BlockSpec((t_block, b_block, hidden_pad),
                               lambda b, t: (t, b, 0)),
        out_shape=jax.ShapeDtypeStruct((s_pad, b_pad, hidden_pad), jnp.float32),
        scratch_shapes=[pltpu.VMEM((b_block, hidden_pad), jnp.float32)],
        compiler_params=pltpu.CompilerParams(
            dimension_semantics=("parallel", "arbitrary")),
    )(gi_seq, w_hh_p, b_hh_p)


def srnn_forward(x_ids, params, *, t_block=16):
    """Equivalent of SRNN.forward.

    x_ids : (B, S) int32 token ids
    returns (B, S, H) outputs, (B, n_layers, H) final hidden states.
    """
    emb = params["embedding"]
    B, S = x_ids.shape
    H = params["gru_layers"][0]["w_hh_t"].shape[0]

    H_pad = _round_up(H, 128)          # lane-align hidden (and every gate)
    B_pad = _round_up(B, 8)            # sublane-align batch
    b_blk = min(B_pad, 128)
    B_pad = _round_up(B_pad, b_blk)
    t_blk = min(t_block, S)
    S_pad = _round_up(S, t_blk)

    # TODO(synk): embedding gather stays in XLA (jnp.take); a scalar-prefetch
    # gather kernel is possible but not worthwhile for this op.
    x = jnp.take(emb, x_ids, axis=0)                          # (B, S, E)
    x = jnp.pad(x, ((0, B_pad - B), (0, S_pad - S), (0, 0)))  # (B_PAD, S_PAD, E)

    hiddens = []
    layer_in = x
    seq_major = False
    for layer in params["gru_layers"]:
        w_ih_p = _pad_gates(layer["w_ih_t"], H, H_pad)        # (in_dim, 3*H_PAD)
        w_hh_p = _pad_gates(layer["w_hh_t"], H, H_pad)
        w_hh_p = jnp.pad(w_hh_p, ((0, H_pad - H), (0, 0)))    # (H_PAD, 3*H_PAD)
        b_ih_p = _pad_gates(layer["b_ih"], H, H_pad)          # (1, 3*H_PAD)
        b_hh_p = _pad_gates(layer["b_hh"], H, H_pad)          # (1, 3*H_PAD)

        # Hoisted input projection: one big GEMM over the whole sequence,
        # emitting seq-major gi directly (no separate transpose pass).
        if not seq_major:
            gi = jnp.einsum('bse,eg->sbg', layer_in, w_ih_p) + b_ih_p
            seq_major = True
        else:
            w_ih_p = jnp.pad(w_ih_p, ((0, H_pad - H), (0, 0)))  # rows H -> H_PAD
            gi = jnp.einsum('sbh,hg->sbg', layer_in, w_ih_p) + b_ih_p

        y = gru_recurrence_pallas(gi, w_hh_p, b_hh_p, hidden_pad=H_pad,
                                  t_block=t_blk, b_block=b_blk)
        hiddens.append(y[S - 1, :B, :H])                      # final hidden (B, H)
        layer_in = y                                          # (S_PAD, B_PAD, H_PAD)

    out = jnp.transpose(layer_in[:S, :B, :H], (1, 0, 2))      # (B, S, H)
    hidden = jnp.stack(hiddens, axis=1)                       # (B, n_layers, H)
    return out, hidden


def init_params(key, vocab_size, embed_dim, hidden_dim, n_layers):
    k_emb, k_gru = jax.random.split(key)
    # nn.Embedding: N(0, 1)
    embedding = jax.random.normal(k_emb, (vocab_size, embed_dim), jnp.float32)
    # nn.GRU: uniform(-1/sqrt(H), 1/sqrt(H)) for all weights/biases
    bound = 1.0 / jnp.sqrt(hidden_dim)
    layers = []
    keys = jax.random.split(k_gru, n_layers * 4)
    for l in range(n_layers):
        in_dim = embed_dim if l == 0 else hidden_dim
        kw1, kw2, kb1, kb2 = keys[4 * l: 4 * l + 4]
        w_ih = jax.random.uniform(kw1, (3 * hidden_dim, in_dim), jnp.float32, -bound, bound)
        w_hh = jax.random.uniform(kw2, (3 * hidden_dim, hidden_dim), jnp.float32, -bound, bound)
        b_ih = jax.random.uniform(kb1, (3 * hidden_dim,), jnp.float32, -bound, bound)
        b_hh = jax.random.uniform(kb2, (3 * hidden_dim,), jnp.float32, -bound, bound)
        layers.append({
            "w_ih_t": w_ih.T,                      # (in_dim, 3H)
            "w_hh_t": w_hh.T,                      # (H, 3H)
            "b_ih": b_ih.reshape(1, -1),           # (1, 3H)
            "b_hh": b_hh.reshape(1, -1),           # (1, 3H)
        })
    return {"embedding": embedding, "gru_layers": layers}


def srnn_reference(x_ids, params):
    """Pure-JAX reference (lax.scan GRU) for correctness checking."""
    emb = params["embedding"]
    x = jnp.take(emb, x_ids, axis=0)
    x = jnp.transpose(x, (1, 0, 2))  # (S, B, E)

    def gru_layer(x_seq, layer):
        H = layer["w_hh_t"].shape[0]
        B = x_seq.shape[1]

        def step(h, x_t):
            gi = x_t @ layer["w_ih_t"] + layer["b_ih"][0]
            gh = h @ layer["w_hh_t"] + layer["b_hh"][0]
            i_r, i_z, i_n = gi[:, :H], gi[:, H:2 * H], gi[:, 2 * H:]
            h_r, h_z, h_n = gh[:, :H], gh[:, H:2 * H], gh[:, 2 * H:]
            r = jax.nn.sigmoid(i_r + h_r)
            z = jax.nn.sigmoid(i_z + h_z)
            n = jnp.tanh(i_n + r * h_n)
            h_new = (1.0 - z) * n + z * h
            return h_new, h_new

        h0 = jnp.zeros((B, H), jnp.float32)
        h_final, ys = jax.lax.scan(step, h0, x_seq)
        return ys, h_final

    hiddens = []
    layer_in = x
    for layer in params["gru_layers"]:
        layer_in, h_final = gru_layer(layer_in, layer)
        hiddens.append(h_final)
    out = jnp.transpose(layer_in, (1, 0, 2))
    hidden = jnp.transpose(jnp.stack(hiddens, axis=0), (1, 0, 2))
    return out, hidden


if __name__ == "__main__":
    vocab_size, embed_dim, hidden_dim, n_layers = 50, 16, 32, 2
    batch, seq = 2, 8

    key = jax.random.PRNGKey(0)
    k_params, k_ids = jax.random.split(key)
    params = init_params(k_params, vocab_size, embed_dim, hidden_dim, n_layers)
    x_ids = jax.random.randint(k_ids, (batch, seq), 0, vocab_size, dtype=jnp.int32)

    fwd = jax.jit(srnn_forward)
    out, hidden = fwd(x_ids, params)
    out = jax.block_until_ready(out)
    hidden = jax.block_until_ready(hidden)

    ref_out, ref_hidden = srnn_reference(x_ids, params)
    assert out.shape == (batch, seq, hidden_dim)
    assert hidden.shape == (batch, n_layers, hidden_dim)
    assert jnp.allclose(out, ref_out, atol=1e-4, rtol=1e-4), \
        float(jnp.max(jnp.abs(out - ref_out)))
    assert jnp.allclose(hidden, ref_hidden, atol=1e-4, rtol=1e-4), \
        float(jnp.max(jnp.abs(hidden - ref_hidden)))

    print("KERNEL_OK")
</pallas_src>

<mosaic_0001>
module attributes {stable_mosaic.version = 11 : i64} {
  func.func @_gru_recurrence_kernel(%arg0: i32, %arg1: i32, %arg2: memref<8x8x384xf32, #tpu.memory_space<vmem>>, %arg3: memref<128x384xf32, #tpu.memory_space<vmem>>, %arg4: memref<1x384xf32, #tpu.memory_space<vmem>>, %arg5: memref<8x8x128xf32, #tpu.memory_space<vmem>>, %arg6: memref<8x128xf32, #tpu.memory_space<vmem>>) attributes {dimension_semantics = [#tpu.dimension_semantics<parallel>, #tpu.dimension_semantics<arbitrary>], iteration_bounds = array<i64: 1, 1>, scalar_prefetch = 0 : i64, scratch_operands = 1 : i64, tpu.core_type = #tpu.core_type<tc>, window_params = [{transform_indices = @transform_0, window_bounds = array<i64: 8, 8, 384>}, {pipeline_mode = #tpu.pipeline_mode<synchronous>, transform_indices = @transform_1, window_bounds = array<i64: 128, 384>}, {pipeline_mode = #tpu.pipeline_mode<synchronous>, transform_indices = @transform_2, window_bounds = array<i64: 1, 384>}, {transform_indices = @transform_3, window_bounds = array<i64: 8, 8, 128>}]} {
    %c0_i32 = arith.constant 0 : i32
    %0 = arith.cmpi eq, %arg1, %c0_i32 : i32
    %1 = arith.extui %0 : i1 to i32
    %c0_i32_0 = arith.constant 0 : i32
    %2 = arith.cmpi ne, %1, %c0_i32_0 : i32
    scf.if %2 {
      %cst_72 = arith.constant 0.000000e+00 : f32
      %304 = vector.broadcast %cst_72 : f32 to vector<8x128xf32>
      %c0_73 = arith.constant 0 : index
      %c0_74 = arith.constant 0 : index
      %305 = vector.load %arg6[%c0_73, %c0_74] : memref<8x128xf32, #tpu.memory_space<vmem>>, vector<8x128xf32>
      tpu.vector_store %arg6[%c0_73, %c0_74], %304 {strides = array<i32>} : memref<8x128xf32, #tpu.memory_space<vmem>>, vector<8x128xf32>,
    } else {
    }
    %c0 = arith.constant 0 : index
    %c0_1 = arith.constant 0 : index
    %3 = vector.load %arg3[%c0, %c0_1] : memref<128x384xf32, #tpu.memory_space<vmem>>, vector<128x384xf32>
    %c0_2 = arith.constant 0 : index
    %c0_3 = arith.constant 0 : index
    %4 = vector.load %arg4[%c0_2, %c0_3] : memref<1x384xf32, #tpu.memory_space<vmem>>, vector<1x384xf32>
    %5 = vector.shape_cast %4 : vector<1x384xf32> to vector<384xf32>
    %c0_4 = arith.constant 0 : index
    %c0_5 = arith.constant 0 : index
    %6 = vector.load %arg6[%c0_4, %c0_5] : memref<8x128xf32, #tpu.memory_space<vmem>>, vector<8x128xf32>
    %c0_i32_6 = arith.constant 0 : i32
    %7 = arith.index_cast %c0_i32_6 : i32 to index
    %c0_7 = arith.constant 0 : index
    %c0_8 = arith.constant 0 : index
    %8 = vector.load %arg2[%7, %c0_7, %c0_8] : memref<8x8x384xf32, #tpu.memory_space<vmem>>, vector<1x8x384xf32>
    %9 = vector.shape_cast %8 : vector<1x8x384xf32> to vector<8x384xf32>
    %cst = arith.constant dense<0.000000e+00> : vector<8x384xf32>
    %10 = tpu.matmul %6, %3, %cst {dimension_numbers = #tpu.dot_dimension_numbers<[1], [0], [0], [1], [0, 0, 1, 1], [], []>} : vector<8x128xf32>, vector<128x384xf32>, vector<8x384xf32> -> vector<8x384xf32>
    %11 = vector.shape_cast %5 : vector<384xf32> to vector<1x384xf32>
    %12 = vector.broadcast %11 : vector<1x384xf32> to vector<8x384xf32>
    %13 = arith.addf %10, %12 : vector<8x384xf32>
    %14 = vector.extract_strided_slice %9 {offsets = [0, 0], sizes = [8, 128], strides = [1, 1]} : vector<8x384xf32> to vector<8x128xf32>
    %15 = vector.extract_strided_slice %13 {offsets = [0, 0], sizes = [8, 128], strides = [1, 1]} : vector<8x384xf32> to vector<8x128xf32>
    %16 = arith.addf %14, %15 : vector<8x128xf32>
    %17 = arith.negf %16 : vector<8x128xf32>
    %18 = math.exp %17 : vector<8x128xf32>
    %cst_9 = arith.constant 1.000000e+00 : f32
    %19 = vector.broadcast %cst_9 : f32 to vector<8x128xf32>
    %20 = arith.addf %19, %18 : vector<8x128xf32>
    %21 = arith.divf %19, %20 : vector<8x128xf32>
    %22 = vector.extract_strided_slice %9 {offsets = [0, 128], sizes = [8, 128], strides = [1, 1]} : vector<8x384xf32> to vector<8x128xf32>
    %23 = vector.extract_strided_slice %13 {offsets = [0, 128], sizes = [8, 128], strides = [1, 1]} : vector<8x384xf32> to vector<8x128xf32>
    %24 = arith.addf %22, %23 : vector<8x128xf32>
    %25 = arith.negf %24 : vector<8x128xf32>
    %26 = math.exp %25 : vector<8x128xf32>
    %cst_10 = arith.constant 1.000000e+00 : f32
    %27 = vector.broadcast %cst_10 : f32 to vector<8x128xf32>
    %28 = arith.addf %27, %26 : vector<8x128xf32>
    %29 = arith.divf %27, %28 : vector<8x128xf32>
    %30 = vector.extract_strided_slice %9 {offsets = [0, 256], sizes = [8, 128], strides = [1, 1]} : vector<8x384xf32> to vector<8x128xf32>
    %31 = vector.extract_strided_slice %13 {offsets = [0, 256], sizes = [8, 128], strides = [1, 1]} : vector<8x384xf32> to vector<8x128xf32>
    %32 = arith.mulf %21, %31 : vector<8x128xf32>
    %33 = arith.addf %30, %32 : vector<8x128xf32>
    %34 = math.tanh %33 : vector<8x128xf32>
    %cst_11 = arith.constant 1.000000e+00 : f32
    %35 = vector.broadcast %cst_11 : f32 to vector<8x128xf32>
    %36 = arith.subf %35, %29 : vector<8x128xf32>
    %37 = arith.mulf %36, %34 : vector<8x128xf32>
    %38 = arith.mulf %29, %6 : vector<8x128xf32>
    %39 = arith.addf %37, %38 : vector<8x128xf32>
    %40 = arith.index_cast %c0_i32_6 : i32 to index
    %c0_12 = arith.constant 0 : index
    %c0_13 = arith.constant 0 : index
    %41 = vector.load %arg5[%40, %c0_12, %c0_13] : memref<8x8x128xf32, #tpu.memory_space<vmem>>, vector<1x8x128xf32>
    %42 = vector.shape_cast %41 : vector<1x8x128xf32> to vector<8x128xf32>
    %43 = vector.shape_cast %39 : vector<8x128xf32> to vector<1x8x128xf32>
    tpu.vector_store %arg5[%40, %c0_12, %c0_13], %43 {strides = array<i32>} : memref<8x8x128xf32, #tpu.memory_space<vmem>>, vector<1x8x128xf32>,
    %c1_i32 = arith.constant 1 : i32
    %44 = arith.index_cast %c1_i32 : i32 to index
    %c0_14 = arith.constant 0 : index
    %c0_15 = arith.constant 0 : index
    %45 = vector.load %arg2[%44, %c0_14, %c0_15] : memref<8x8x384xf32, #tpu.memory_space<vmem>>, vector<1x8x384xf32>
    %46 = vector.shape_cast %45 : vector<1x8x384xf32> to vector<8x384xf32>
    %cst_16 = arith.constant dense<0.000000e+00> : vector<8x384xf32>
    %47 = tpu.matmul %39, %3, %cst_16 {dimension_numbers = #tpu.dot_dimension_numbers<[1], [0], [0], [1], [0, 0, 1, 1], [], []>} : vector<8x128xf32>, vector<128x384xf32>, vector<8x384xf32> -> vector<8x384xf32>
    %48 = vector.shape_cast %5 : vector<384xf32> to vector<1x384xf32>
    %49 = vector.broadcast %48 : vector<1x384xf32> to vector<8x384xf32>
    %50 = arith.addf %47, %49 : vector<8x384xf32>
    %51 = vector.extract_strided_slice %46 {offsets = [0, 0], sizes = [8, 128], strides = [1, 1]} : vector<8x384xf32> to vector<8x128xf32>
    %52 = vector.extract_strided_slice %50 {offsets = [0, 0], sizes = [8, 128], strides = [1, 1]} : vector<8x384xf32> to vector<8x128xf32>
    %53 = arith.addf %51, %52 : vector<8x128xf32>
    %54 = arith.negf %53 : vector<8x128xf32>
    %55 = math.exp %54 : vector<8x128xf32>
    %cst_17 = arith.constant 1.000000e+00 : f32
    %56 = vector.broadcast %cst_17 : f32 to vector<8x128xf32>
    %57 = arith.addf %56, %55 : vector<8x128xf32>
    %58 = arith.divf %56, %57 : vector<8x128xf32>
    %59 = vector.extract_strided_slice %46 {offsets = [0, 128], sizes = [8, 128], strides = [1, 1]} : vector<8x384xf32> to vector<8x128xf32>
    %60 = vector.extract_strided_slice %50 {offsets = [0, 128], sizes = [8, 128], strides = [1, 1]} : vector<8x384xf32> to vector<8x128xf32>
    %61 = arith.addf %59, %60 : vector<8x128xf32>
    %62 = arith.negf %61 : vector<8x128xf32>
    %63 = math.exp %62 : vector<8x128xf32>
    %cst_18 = arith.constant 1.000000e+00 : f32
    %64 = vector.broadcast %cst_18 : f32 to vector<8x128xf32>
    %65 = arith.addf %64, %63 : vector<8x128xf32>
    %66 = arith.divf %64, %65 : vector<8x128xf32>
    %67 = vector.extract_strided_slice %46 {offsets = [0, 256], sizes = [8, 128], strides = [1, 1]} : vector<8x384xf32> to vector<8x128xf32>
    %68 = vector.extract_strided_slice %50 {offsets = [0, 256], sizes = [8, 128], strides = [1, 1]} : vector<8x384xf32> to vector<8x128xf32>
    %69 = arith.mulf %58, %68 : vector<8x128xf32>
    %70 = arith.addf %67, %69 : vector<8x128xf32>
    %71 = math.tanh %70 : vector<8x128xf32>
    %cst_19 = arith.constant 1.000000e+00 : f32
    %72 = vector.broadcast %cst_19 : f32 to vector<8x128xf32>
    %73 = arith.subf %72, %66 : vector<8x128xf32>
    %74 = arith.mulf %73, %71 : vector<8x128xf32>
    %75 = arith.mulf %66, %39 : vector<8x128xf32>
    %76 = arith.addf %74, %75 : vector<8x128xf32>
    %77 = arith.index_cast %c1_i32 : i32 to index
    %c0_20 = arith.constant 0 : index
    %c0_21 = arith.constant 0 : index
    %78 = vector.load %arg5[%77, %c0_20, %c0_21] : memref<8x8x128xf32, #tpu.memory_space<vmem>>, vector<1x8x128xf32>
    %79 = vector.shape_cast %78 : vector<1x8x128xf32> to vector<8x128xf32>
    %80 = vector.shape_cast %76 : vector<8x128xf32> to vector<1x8x128xf32>
    tpu.vector_store %arg5[%77, %c0_20, %c0_21], %80 {strides = array<i32>} : memref<8x8x128xf32, #tpu.memory_space<vmem>>, vector<1x8x128xf32>,
    %c2_i32 = arith.constant 2 : i32
    %81 = arith.index_cast %c2_i32 : i32 to index
    %c0_22 = arith.constant 0 : index
    %c0_23 = arith.constant 0 : index
    %82 = vector.load %arg2[%81, %c0_22, %c0_23] : memref<8x8x384xf32, #tpu.memory_space<vmem>>, vector<1x8x384xf32>
    %83 = vector.shape_cast %82 : vector<1x8x384xf32> to vector<8x384xf32>
    %cst_24 = arith.constant dense<0.000000e+00> : vector<8x384xf32>
    %84 = tpu.matmul %76, %3, %cst_24 {dimension_numbers = #tpu.dot_dimension_numbers<[1], [0], [0], [1], [0, 0, 1, 1], [], []>} : vector<8x128xf32>, vector<128x384xf32>, vector<8x384xf32> -> vector<8x384xf32>
    %85 = vector.shape_cast %5 : vector<384xf32> to vector<1x384xf32>
    %86 = vector.broadcast %85 : vector<1x384xf32> to vector<8x384xf32>
    %87 = arith.addf %84, %86 : vector<8x384xf32>
    %88 = vector.extract_strided_slice %83 {offsets = [0, 0], sizes = [8, 128], strides = [1, 1]} : vector<8x384xf32> to vector<8x128xf32>
    %89 = vector.extract_strided_slice %87 {offsets = [0, 0], sizes = [8, 128], strides = [1, 1]} : vector<8x384xf32> to vector<8x128xf32>
    %90 = arith.addf %88, %89 : vector<8x128xf32>
    %91 = arith.negf %90 : vector<8x128xf32>
    %92 = math.exp %91 : vector<8x128xf32>
    %cst_25 = arith.constant 1.000000e+00 : f32
    %93 = vector.broadcast %cst_25 : f32 to vector<8x128xf32>
    %94 = arith.addf %93, %92 : vector<8x128xf32>
    %95 = arith.divf %93, %94 : vector<8x128xf32>
    %96 = vector.extract_strided_slice %83 {offsets = [0, 128], sizes = [8, 128], strides = [1, 1]} : vector<8x384xf32> to vector<8x128xf32>
    %97 = vector.extract_strided_slice %87 {offsets = [0, 128], sizes = [8, 128], strides = [1, 1]} : vector<8x384xf32> to vector<8x128xf32>
    %98 = arith.addf %96, %97 : vector<8x128xf32>
    %99 = arith.negf %98 : vector<8x128xf32>
    %100 = math.exp %99 : vector<8x128xf32>
    %cst_26 = arith.constant 1.000000e+00 : f32
    %101 = vector.broadcast %cst_26 : f32 to vector<8x128xf32>
    %102 = arith.addf %101, %100 : vector<8x128xf32>
    %103 = arith.divf %101, %102 : vector<8x128xf32>
    %104 = vector.extract_strided_slice %83 {offsets = [0, 256], sizes = [8, 128], strides = [1, 1]} : vector<8x384xf32> to vector<8x128xf32>
    %105 = vector.extract_strided_slice %87 {offsets = [0, 256], sizes = [8, 128], strides = [1, 1]} : vector<8x384xf32> to vector<8x128xf32>
    %106 = arith.mulf %95, %105 : vector<8x128xf32>
    %107 = arith.addf %104, %106 : vector<8x128xf32>
    %108 = math.tanh %107 : vector<8x128xf32>
    %cst_27 = arith.constant 1.000000e+00 : f32
    %109 = vector.broadcast %cst_27 : f32 to vector<8x128xf32>
    %110 = arith.subf %109, %103 : vector<8x128xf32>
    %111 = arith.mulf %110, %108 : vector<8x128xf32>
    %112 = arith.mulf %103, %76 : vector<8x128xf32>
    %113 = arith.addf %111, %112 : vector<8x128xf32>
    %114 = arith.index_cast %c2_i32 : i32 to index
    %c0_28 = arith.constant 0 : index
    %c0_29 = arith.constant 0 : index
    %115 = vector.load %arg5[%114, %c0_28, %c0_29] : memref<8x8x128xf32, #tpu.memory_space<vmem>>, vector<1x8x128xf32>
    %116 = vector.shape_cast %115 : vector<1x8x128xf32> to vector<8x128xf32>
    %117 = vector.shape_cast %113 : vector<8x128xf32> to vector<1x8x128xf32>
    tpu.vector_store %arg5[%114, %c0_28, %c0_29], %117 {strides = array<i32>} : memref<8x8x128xf32, #tpu.memory_space<vmem>>, vector<1x8x128xf32>,
    %c3_i32 = arith.constant 3 : i32
    %118 = arith.index_cast %c3_i32 : i32 to index
    %c0_30 = arith.constant 0 : index
    %c0_31 = arith.constant 0 : index
    %119 = vector.load %arg2[%118, %c0_30, %c0_31] : memref<8x8x384xf32, #tpu.memory_space<vmem>>, vector<1x8x384xf32>
    %120 = vector.shape_cast %119 : vector<1x8x384xf32> to vector<8x384xf32>
    %cst_32 = arith.constant dense<0.000000e+00> : vector<8x384xf32>
    %121 = tpu.matmul %113, %3, %cst_32 {dimension_numbers = #tpu.dot_dimension_numbers<[1], [0], [0], [1], [0, 0, 1, 1], [], []>} : vector<8x128xf32>, vector<128x384xf32>, vector<8x384xf32> -> vector<8x384xf32>
    %122 = vector.shape_cast %5 : vector<384xf32> to vector<1x384xf32>
    %123 = vector.broadcast %122 : vector<1x384xf32> to vector<8x384xf32>
    %124 = arith.addf %121, %123 : vector<8x384xf32>
    %125 = vector.extract_strided_slice %120 {offsets = [0, 0], sizes = [8, 128], strides = [1, 1]} : vector<8x384xf32> to vector<8x128xf32>
    %126 = vector.extract_strided_slice %124 {offsets = [0, 0], sizes = [8, 128], strides = [1, 1]} : vector<8x384xf32> to vector<8x128xf32>
    %127 = arith.addf %125, %126 : vector<8x128xf32>
    %128 = arith.negf %127 : vector<8x128xf32>
    %129 = math.exp %128 : vector<8x128xf32>
    %cst_33 = arith.constant 1.000000e+00 : f32
    %130 = vector.broadcast %cst_33 : f32 to vector<8x128xf32>
    %131 = arith.addf %130, %129 : vector<8x128xf32>
    %132 = arith.divf %130, %131 : vector<8x128xf32>
    %133 = vector.extract_strided_slice %120 {offsets = [0, 128], sizes = [8, 128], strides = [1, 1]} : vector<8x384xf32> to vector<8x128xf32>
    %134 = vector.extract_strided_slice %124 {offsets = [0, 128], sizes = [8, 128], strides = [1, 1]} : vector<8x384xf32> to vector<8x128xf32>
    %135 = arith.addf %133, %134 : vector<8x128xf32>
    %136 = arith.negf %135 : vector<8x128xf32>
    %137 = math.exp %136 : vector<8x128xf32>
    %cst_34 = arith.constant 1.000000e+00 : f32
    %138 = vector.broadcast %cst_34 : f32 to vector<8x128xf32>
    %139 = arith.addf %138, %137 : vector<8x128xf32>
    %140 = arith.divf %138, %139 : vector<8x128xf32>
    %141 = vector.extract_strided_slice %120 {offsets = [0, 256], sizes = [8, 128], strides = [1, 1]} : vector<8x384xf32> to vector<8x128xf32>
    %142 = vector.extract_strided_slice %124 {offsets = [0, 256], sizes = [8, 128], strides = [1, 1]} : vector<8x384xf32> to vector<8x128xf32>
    %143 = arith.mulf %132, %142 : vector<8x128xf32>
    %144 = arith.addf %141, %143 : vector<8x128xf32>
    %145 = math.tanh %144 : vector<8x128xf32>
    %cst_35 = arith.constant 1.000000e+00 : f32
    %146 = vector.broadcast %cst_35 : f32 to vector<8x128xf32>
    %147 = arith.subf %146, %140 : vector<8x128xf32>
    %148 = arith.mulf %147, %145 : vector<8x128xf32>
    %149 = arith.mulf %140, %113 : vector<8x128xf32>
    %150 = arith.addf %148, %149 : vector<8x128xf32>
    %151 = arith.index_cast %c3_i32 : i32 to index
    %c0_36 = arith.constant 0 : index
    %c0_37 = arith.constant 0 : index
    %152 = vector.load %arg5[%151, %c0_36, %c0_37] : memref<8x8x128xf32, #tpu.memory_space<vmem>>, vector<1x8x128xf32>
    %153 = vector.shape_cast %152 : vector<1x8x128xf32> to vector<8x128xf32>
    %154 = vector.shape_cast %150 : vector<8x128xf32> to vector<1x8x128xf32>
    tpu.vector_store %arg5[%151, %c0_36, %c0_37], %154 {strides = array<i32>} : memref<8x8x128xf32, #tpu.memory_space<vmem>>, vector<1x8x128xf32>,
    %c4_i32 = arith.constant 4 : i32
    %155 = arith.index_cast %c4_i32 : i32 to index
    %c0_38 = arith.constant 0 : index
    %c0_39 = arith.constant 0 : index
    %156 = vector.load %arg2[%155, %c0_38, %c0_39] : memref<8x8x384xf32, #tpu.memory_space<vmem>>, vector<1x8x384xf32>
    %157 = vector.shape_cast %156 : vector<1x8x384xf32> to vector<8x384xf32>
    %cst_40 = arith.constant dense<0.000000e+00> : vector<8x384xf32>
    %158 = tpu.matmul %150, %3, %cst_40 {dimension_numbers = #tpu.dot_dimension_numbers<[1], [0], [0], [1], [0, 0, 1, 1], [], []>} : vector<8x128xf32>, vector<128x384xf32>, vector<8x384xf32> -> vector<8x384xf32>
    %159 = vector.shape_cast %5 : vector<384xf32> to vector<1x384xf32>
    %160 = vector.broadcast %159 : vector<1x384xf32> to vector<8x384xf32>
    %161 = arith.addf %158, %160 : vector<8x384xf32>
    %162 = vector.extract_strided_slice %157 {offsets = [0, 0], sizes = [8, 128], strides = [1, 1]} : vector<8x384xf32> to vector<8x128xf32>
    %163 = vector.extract_strided_slice %161 {offsets = [0, 0], sizes = [8, 128], strides = [1, 1]} : vector<8x384xf32> to vector<8x128xf32>
    %164 = arith.addf %162, %163 : vector<8x128xf32>
    %165 = arith.negf %164 : vector<8x128xf32>
    %166 = math.exp %165 : vector<8x128xf32>
    %cst_41 = arith.constant 1.000000e+00 : f32
    %167 = vector.broadcast %cst_41 : f32 to vector<8x128xf32>
    %168 = arith.addf %167, %166 : vector<8x128xf32>
    %169 = arith.divf %167, %168 : vector<8x128xf32>
    %170 = vector.extract_strided_slice %157 {offsets = [0, 128], sizes = [8, 128], strides = [1, 1]} : vector<8x384xf32> to vector<8x128xf32>
    %171 = vector.extract_strided_slice %161 {offsets = [0, 128], sizes = [8, 128], strides = [1, 1]} : vector<8x384xf32> to vector<8x128xf32>
    %172 = arith.addf %170, %171 : vector<8x128xf32>
    %173 = arith.negf %172 : vector<8x128xf32>
    %174 = math.exp %173 : vector<8x128xf32>
    %cst_42 = arith.constant 1.000000e+00 : f32
    %175 = vector.broadcast %cst_42 : f32 to vector<8x128xf32>
    %176 = arith.addf %175, %174 : vector<8x128xf32>
    %177 = arith.divf %175, %176 : vector<8x128xf32>
    %178 = vector.extract_strided_slice %157 {offsets = [0, 256], sizes = [8, 128], strides = [1, 1]} : vector<8x384xf32> to vector<8x128xf32>
    %179 = vector.extract_strided_slice %161 {offsets = [0, 256], sizes = [8, 128], strides = [1, 1]} : vector<8x384xf32> to vector<8x128xf32>
    %180 = arith.mulf %169, %179 : vector<8x128xf32>
    %181 = arith.addf %178, %180 : vector<8x128xf32>
    %182 = math.tanh %181 : vector<8x128xf32>
    %cst_43 = arith.constant 1.000000e+00 : f32
    %183 = vector.broadcast %cst_43 : f32 to vector<8x128xf32>
    %184 = arith.subf %183, %177 : vector<8x128xf32>
    %185 = arith.mulf %184, %182 : vector<8x128xf32>
    %186 = arith.mulf %177, %150 : vector<8x128xf32>
    %187 = arith.addf %185, %186 : vector<8x128xf32>
    %188 = arith.index_cast %c4_i32 : i32 to index
    %c0_44 = arith.constant 0 : index
    %c0_45 = arith.constant 0 : index
    %189 = vector.load %arg5[%188, %c0_44, %c0_45] : memref<8x8x128xf32, #tpu.memory_space<vmem>>, vector<1x8x128xf32>
    %190 = vector.shape_cast %189 : vector<1x8x128xf32> to vector<8x128xf32>
    %191 = vector.shape_cast %187 : vector<8x128xf32> to vector<1x8x128xf32>
    tpu.vector_store %arg5[%188, %c0_44, %c0_45], %191 {strides = array<i32>} : memref<8x8x128xf32, #tpu.memory_space<vmem>>, vector<1x8x128xf32>,
    %c5_i32 = arith.constant 5 : i32
    %192 = arith.index_cast %c5_i32 : i32 to index
    %c0_46 = arith.constant 0 : index
    %c0_47 = arith.constant 0 : index
    %193 = vector.load %arg2[%192, %c0_46, %c0_47] : memref<8x8x384xf32, #tpu.memory_space<vmem>>, vector<1x8x384xf32>
    %194 = vector.shape_cast %193 : vector<1x8x384xf32> to vector<8x384xf32>
    %cst_48 = arith.constant dense<0.000000e+00> : vector<8x384xf32>
    %195 = tpu.matmul %187, %3, %cst_48 {dimension_numbers = #tpu.dot_dimension_numbers<[1], [0], [0], [1], [0, 0, 1, 1], [], []>} : vector<8x128xf32>, vector<128x384xf32>, vector<8x384xf32> -> vector<8x384xf32>
    %196 = vector.shape_cast %5 : vector<384xf32> to vector<1x384xf32>
    %197 = vector.broadcast %196 : vector<1x384xf32> to vector<8x384xf32>
    %198 = arith.addf %195, %197 : vector<8x384xf32>
    %199 = vector.extract_strided_slice %194 {offsets = [0, 0], sizes = [8, 128], strides = [1, 1]} : vector<8x384xf32> to vector<8x128xf32>
    %200 = vector.extract_strided_slice %198 {offsets = [0, 0], sizes = [8, 128], strides = [1, 1]} : vector<8x384xf32> to vector<8x128xf32>
    %201 = arith.addf %199, %200 : vector<8x128xf32>
    %202 = arith.negf %201 : vector<8x128xf32>
    %203 = math.exp %202 : vector<8x128xf32>
    %cst_49 = arith.constant 1.000000e+00 : f32
    %204 = vector.broadcast %cst_49 : f32 to vector<8x128xf32>
    %205 = arith.addf %204, %203 : vector<8x128xf32>
    %206 = arith.divf %204, %205 : vector<8x128xf32>
    %207 = vector.extract_strided_slice %194 {offsets = [0, 128], sizes = [8, 128], strides = [1, 1]} : vector<8x384xf32> to vector<8x128xf32>
    %208 = vector.extract_strided_slice %198 {offsets = [0, 128], sizes = [8, 128], strides = [1, 1]} : vector<8x384xf32> to vector<8x128xf32>
    %209 = arith.addf %207, %208 : vector<8x128xf32>
    %210 = arith.negf %209 : vector<8x128xf32>
    %211 = math.exp %210 : vector<8x128xf32>
    %cst_50 = arith.constant 1.000000e+00 : f32
    %212 = vector.broadcast %cst_50 : f32 to vector<8x128xf32>
    %213 = arith.addf %212, %211 : vector<8x128xf32>
    %214 = arith.divf %212, %213 : vector<8x128xf32>
    %215 = vector.extract_strided_slice %194 {offsets = [0, 256], sizes = [8, 128], strides = [1, 1]} : vector<8x384xf32> to vector<8x128xf32>
    %216 = vector.extract_strided_slice %198 {offsets = [0, 256], sizes = [8, 128], strides = [1, 1]} : vector<8x384xf32> to vector<8x128xf32>
    %217 = arith.mulf %206, %216 : vector<8x128xf32>
    %218 = arith.addf %215, %217 : vector<8x128xf32>
    %219 = math.tanh %218 : vector<8x128xf32>
    %cst_51 = arith.constant 1.000000e+00 : f32
    %220 = vector.broadcast %cst_51 : f32 to vector<8x128xf32>
    %221 = arith.subf %220, %214 : vector<8x128xf32>
    %222 = arith.mulf %221, %219 : vector<8x128xf32>
    %223 = arith.mulf %214, %187 : vector<8x128xf32>
    %224 = arith.addf %222, %223 : vector<8x128xf32>
    %225 = arith.index_cast %c5_i32 : i32 to index
    %c0_52 = arith.constant 0 : index
    %c0_53 = arith.constant 0 : index
    %226 = vector.load %arg5[%225, %c0_52, %c0_53] : memref<8x8x128xf32, #tpu.memory_space<vmem>>, vector<1x8x128xf32>
    %227 = vector.shape_cast %226 : vector<1x8x128xf32> to vector<8x128xf32>
    %228 = vector.shape_cast %224 : vector<8x128xf32> to vector<1x8x128xf32>
    tpu.vector_store %arg5[%225, %c0_52, %c0_53], %228 {strides = array<i32>} : memref<8x8x128xf32, #tpu.memory_space<vmem>>, vector<1x8x128xf32>,
    %c6_i32 = arith.constant 6 : i32
    %229 = arith.index_cast %c6_i32 : i32 to index
    %c0_54 = arith.constant 0 : index
    %c0_55 = arith.constant 0 : index
    %230 = vector.load %arg2[%229, %c0_54, %c0_55] : memref<8x8x384xf32, #tpu.memory_space<vmem>>, vector<1x8x384xf32>
    %231 = vector.shape_cast %230 : vector<1x8x384xf32> to vector<8x384xf32>
    %cst_56 = arith.constant dense<0.000000e+00> : vector<8x384xf32>
    %232 = tpu.matmul %224, %3, %cst_56 {dimension_numbers = #tpu.dot_dimension_numbers<[1], [0], [0], [1], [0, 0, 1, 1], [], []>} : vector<8x128xf32>, vector<128x384xf32>, vector<8x384xf32> -> vector<8x384xf32>
    %233 = vector.shape_cast %5 : vector<384xf32> to vector<1x384xf32>
    %234 = vector.broadcast %233 : vector<1x384xf32> to vector<8x384xf32>
    %235 = arith.addf %232, %234 : vector<8x384xf32>
    %236 = vector.extract_strided_slice %231 {offsets = [0, 0], sizes = [8, 128], strides = [1, 1]} : vector<8x384xf32> to vector<8x128xf32>
    %237 = vector.extract_strided_slice %235 {offsets = [0, 0], sizes = [8, 128], strides = [1, 1]} : vector<8x384xf32> to vector<8x128xf32>
    %238 = arith.addf %236, %237 : vector<8x128xf32>
    %239 = arith.negf %238 : vector<8x128xf32>
    %240 = math.exp %239 : vector<8x128xf32>
    %cst_57 = arith.constant 1.000000e+00 : f32
    %241 = vector.broadcast %cst_57 : f32 to vector<8x128xf32>
    %242 = arith.addf %241, %240 : vector<8x128xf32>
    %243 = arith.divf %241, %242 : vector<8x128xf32>
    %244 = vector.extract_strided_slice %231 {offsets = [0, 128], sizes = [8, 128], strides = [1, 1]} : vector<8x384xf32> to vector<8x128xf32>
    %245 = vector.extract_strided_slice %235 {offsets = [0, 128], sizes = [8, 128], strides = [1, 1]} : vector<8x384xf32> to vector<8x128xf32>
    %246 = arith.addf %244, %245 : vector<8x128xf32>
    %247 = arith.negf %246 : vector<8x128xf32>
    %248 = math.exp %247 : vector<8x128xf32>
    %cst_58 = arith.constant 1.000000e+00 : f32
    %249 = vector.broadcast %cst_58 : f32 to vector<8x128xf32>
    %250 = arith.addf %249, %248 : vector<8x128xf32>
    %251 = arith.divf %249, %250 : vector<8x128xf32>
    %252 = vector.extract_strided_slice %231 {offsets = [0, 256], sizes = [8, 128], strides = [1, 1]} : vector<8x384xf32> to vector<8x128xf32>
    %253 = vector.extract_strided_slice %235 {offsets = [0, 256], sizes = [8, 128], strides = [1, 1]} : vector<8x384xf32> to vector<8x128xf32>
    %254 = arith.mulf %243, %253 : vector<8x128xf32>
    %255 = arith.addf %252, %254 : vector<8x128xf32>
    %256 = math.tanh %255 : vector<8x128xf32>
    %cst_59 = arith.constant 1.000000e+00 : f32
    %257 = vector.broadcast %cst_59 : f32 to vector<8x128xf32>
    %258 = arith.subf %257, %251 : vector<8x128xf32>
    %259 = arith.mulf %258, %256 : vector<8x128xf32>
    %260 = arith.mulf %251, %224 : vector<8x128xf32>
    %261 = arith.addf %259, %260 : vector<8x128xf32>
    %262 = arith.index_cast %c6_i32 : i32 to index
    %c0_60 = arith.constant 0 : index
    %c0_61 = arith.constant 0 : index
    %263 = vector.load %arg5[%262, %c0_60, %c0_61] : memref<8x8x128xf32, #tpu.memory_space<vmem>>, vector<1x8x128xf32>
    %264 = vector.shape_cast %263 : vector<1x8x128xf32> to vector<8x128xf32>
    %265 = vector.shape_cast %261 : vector<8x128xf32> to vector<1x8x128xf32>
    tpu.vector_store %arg5[%262, %c0_60, %c0_61], %265 {strides = array<i32>} : memref<8x8x128xf32, #tpu.memory_space<vmem>>, vector<1x8x128xf32>,
    %c7_i32 = arith.constant 7 : i32
    %266 = arith.index_cast %c7_i32 : i32 to index
    %c0_62 = arith.constant 0 : index
    %c0_63 = arith.constant 0 : index
    %267 = vector.load %arg2[%266, %c0_62, %c0_63] : memref<8x8x384xf32, #tpu.memory_space<vmem>>, vector<1x8x384xf32>
    %268 = vector.shape_cast %267 : vector<1x8x384xf32> to vector<8x384xf32>
    %cst_64 = arith.constant dense<0.000000e+00> : vector<8x384xf32>
    %269 = tpu.matmul %261, %3, %cst_64 {dimension_numbers = #tpu.dot_dimension_numbers<[1], [0], [0], [1], [0, 0, 1, 1], [], []>} : vector<8x128xf32>, vector<128x384xf32>, vector<8x384xf32> -> vector<8x384xf32>
    %270 = vector.shape_cast %5 : vector<384xf32> to vector<1x384xf32>
    %271 = vector.broadcast %270 : vector<1x384xf32> to vector<8x384xf32>
    %272 = arith.addf %269, %271 : vector<8x384xf32>
    %273 = vector.extract_strided_slice %268 {offsets = [0, 0], sizes = [8, 128], strides = [1, 1]} : vector<8x384xf32> to vector<8x128xf32>
    %274 = vector.extract_strided_slice %272 {offsets = [0, 0], sizes = [8, 128], strides = [1, 1]} : vector<8x384xf32> to vector<8x128xf32>
    %275 = arith.addf %273, %274 : vector<8x128xf32>
    %276 = arith.negf %275 : vector<8x128xf32>
    %277 = math.exp %276 : vector<8x128xf32>
    %cst_65 = arith.constant 1.000000e+00 : f32
    %278 = vector.broadcast %cst_65 : f32 to vector<8x128xf32>
    %279 = arith.addf %278, %277 : vector<8x128xf32>
    %280 = arith.divf %278, %279 : vector<8x128xf32>
    %281 = vector.extract_strided_slice %268 {offsets = [0, 128], sizes = [8, 128], strides = [1, 1]} : vector<8x384xf32> to vector<8x128xf32>
    %282 = vector.extract_strided_slice %272 {offsets = [0, 128], sizes = [8, 128], strides = [1, 1]} : vector<8x384xf32> to vector<8x128xf32>
    %283 = arith.addf %281, %282 : vector<8x128xf32>
    %284 = arith.negf %283 : vector<8x128xf32>
    %285 = math.exp %284 : vector<8x128xf32>
    %cst_66 = arith.constant 1.000000e+00 : f32
    %286 = vector.broadcast %cst_66 : f32 to vector<8x128xf32>
    %287 = arith.addf %286, %285 : vector<8x128xf32>
    %288 = arith.divf %286, %287 : vector<8x128xf32>
    %289 = vector.extract_strided_slice %268 {offsets = [0, 256], sizes = [8, 128], strides = [1, 1]} : vector<8x384xf32> to vector<8x128xf32>
    %290 = vector.extract_strided_slice %272 {offsets = [0, 256], sizes = [8, 128], strides = [1, 1]} : vector<8x384xf32> to vector<8x128xf32>
    %291 = arith.mulf %280, %290 : vector<8x128xf32>
    %292 = arith.addf %289, %291 : vector<8x128xf32>
    %293 = math.tanh %292 : vector<8x128xf32>
    %cst_67 = arith.constant 1.000000e+00 : f32
    %294 = vector.broadcast %cst_67 : f32 to vector<8x128xf32>
    %295 = arith.subf %294, %288 : vector<8x128xf32>
    %296 = arith.mulf %295, %293 : vector<8x128xf32>
    %297 = arith.mulf %288, %261 : vector<8x128xf32>
    %298 = arith.addf %296, %297 : vector<8x128xf32>
    %299 = arith.index_cast %c7_i32 : i32 to index
    %c0_68 = arith.constant 0 : index
    %c0_69 = arith.constant 0 : index
    %300 = vector.load %arg5[%299, %c0_68, %c0_69] : memref<8x8x128xf32, #tpu.memory_space<vmem>>, vector<1x8x128xf32>
    %301 = vector.shape_cast %300 : vector<1x8x128xf32> to vector<8x128xf32>
    %302 = vector.shape_cast %298 : vector<8x128xf32> to vector<1x8x128xf32>
    tpu.vector_store %arg5[%299, %c0_68, %c0_69], %302 {strides = array<i32>} : memref<8x8x128xf32, #tpu.memory_space<vmem>>, vector<1x8x128xf32>,
    %c8_i32 = arith.constant 8 : i32
    %c0_70 = arith.constant 0 : index
    %c0_71 = arith.constant 0 : index
    %303 = vector.load %arg6[%c0_70, %c0_71] : memref<8x128xf32, #tpu.memory_space<vmem>>, vector<8x128xf32>
    tpu.vector_store %arg6[%c0_70, %c0_71], %298 {strides = array<i32>} : memref<8x128xf32, #tpu.memory_space<vmem>>, vector<8x128xf32>,
    return
  }
  func.func @transform_0(%arg0: i32, %arg1: i32) -> (i32, i32, i32) {
    %c0_i32 = arith.constant 0 : i32
    %c0_i32_0 = arith.constant 0 : i32
    return %arg1, %arg0, %c0_i32 : i32, i32, i32
  }
  func.func @transform_1(%arg0: i32, %arg1: i32) -> (i32, i32) {
    %c0_i32 = arith.constant 0 : i32
    %c0_i32_0 = arith.constant 0 : i32
    %c0_i32_1 = arith.constant 0 : i32
    return %c0_i32, %c0_i32_0 : i32, i32
  }
  func.func @transform_2(%arg0: i32, %arg1: i32) -> (i32, i32) {
    %c0_i32 = arith.constant 0 : i32
    %c0_i32_0 = arith.constant 0 : i32
    %c0_i32_1 = arith.constant 0 : i32
    return %c0_i32, %c0_i32_0 : i32, i32
  }
  func.func @transform_3(%arg0: i32, %arg1: i32) -> (i32, i32, i32) {
    %c0_i32 = arith.constant 0 : i32
    %c0_i32_0 = arith.constant 0 : i32
    return %arg1, %arg0, %c0_i32 : i32, i32, i32
  }
}

</mosaic_0001>

<llo_original>
// kernel: srnn_forward.2
$region0: #{srnn_forward.2}
  #allocation0 [shape = 'u32[]', space=smem, size = 0x4, offset = 0x4, fixed_abs, tag = 'smem constant byte address 0x4 - core index']
  #allocation1 [shape = 'u32[72,128]{1,0:T(1,128)}', space=vmem, size = 0x9000, scoped, tag = 'internal scratch']
  #allocation2 [shape = 'f32[8,128]{1,0:T(8,128)}', space=vmem, size = 0x1000, scoped, tag = 'scratch operand']
  %s0 = inlined_call_operand.vmem [shape: f32[8,8,384], index: 0, kind: input, shape index: {}]
  %s1 = inlined_call_operand.vmem [shape: f32[128,384], index: 1, kind: input, shape index: {}]
  %s2 = inlined_call_operand.vmem [shape: f32[1,384], index: 2, kind: input, shape index: {}]
  %s3 = inlined_call_operand.vmem [shape: f32[8,8,128], index: 3, kind: output, shape index: {}]
  %s4 = sld [smem:[#allocation0]]
  $region26: #{srnn_forward.2} parent=0
    _
  %s6 = ssub.s32 1, %s4
  %s7 = scalar_select 0, %s6, %s4
  // Predicated region
  $region2: #{srnn_forward.2} parent=0 // pred_check
    _
  $region3: #{srnn_forward.2} parent=0 // pred_check_branch
    %9 = sbr.rel (0) target = $region5
  $region4: #{srnn_forward.2} parent=0 // pred_region
    _
  $region5: #{srnn_forward.2} parent=0 // pred_fallthru
    _
  // Predicated region
  $region6: #{srnn_forward.2} parent=0 // pred_check
    _
  $region7: #{srnn_forward.2} parent=0 // pred_check_branch
    %11 = sbr.rel (0) target = $region9
  $region8: #{srnn_forward.2} parent=0 // pred_region
    _
  $region9: #{srnn_forward.2} parent=0 // pred_fallthru
    _
  // Predicated region
  $region10: #{srnn_forward.2} parent=0 // pred_check
    _
  $region11: #{srnn_forward.2} parent=0 // pred_check_branch
    %13 = sbr.rel (0) target = $region13
  $region12: #{srnn_forward.2} parent=0 // pred_region
    _
  $region13: #{srnn_forward.2} parent=0 // pred_fallthru
    _
  %p14 = scmp.eq.s32.totalorder 0, 0
  // Predicated region
  $region14: #{srnn_forward.2} parent=0 // pred_check
    %p15 = pneg %p14
  $region15: #{srnn_forward.2} parent=0 // pred_check_branch
    %17 = sbr.rel (%p15) target = $region17
  $region16: #{srnn_forward.2} parent=0 // pred_region
    %18 = vst [vmem:[#allocation2] sm:$0xff] 0.0
  $region17: #{srnn_forward.2} parent=0 // pred_fallthru
    _
  %v19 = vld [vmem:[%s1] sm:$0xff]
  %v20 = vld [vmem:[%s1 + $0x8] sm:$0xff]
  %v21 = vld [vmem:[%s1 + $0x10] sm:$0xff]
  %v22 = vld [vmem:[%s1 + $0x18] sm:$0xff]
  %v23 = vld [vmem:[%s1 + $0x20] sm:$0xff]
  %v24 = vld [vmem:[%s1 + $0x28] sm:$0xff]
  %v25 = vld [vmem:[%s1 + $0x30] sm:$0xff]
  %v26 = vld [vmem:[%s1 + $0x38] sm:$0xff]
  %v27 = vld [vmem:[%s1 + $0x40] sm:$0xff]
  %v28 = vld [vmem:[%s1 + $0x48] sm:$0xff]
  %v29 = vld [vmem:[%s1 + $0x50] sm:$0xff]
  %v30 = vld [vmem:[%s1 + $0x58] sm:$0xff]
  %v31 = vld [vmem:[%s1 + $0x60] sm:$0xff]
  %v32 = vld [vmem:[%s1 + $0x68] sm:$0xff]
  %v33 = vld [vmem:[%s1 + $0x70] sm:$0xff]
  %v34 = vld [vmem:[%s1 + $0x78] sm:$0xff]
  %v35 = vld [vmem:[%s1 + $0x80] sm:$0xff]
  %v36 = vld [vmem:[%s1 + $0x88] sm:$0xff]
  %v37 = vld [vmem:[%s1 + $0x90] sm:$0xff]
  %v38 = vld [vmem:[%s1 + $0x98] sm:$0xff]
  %v39 = vld [vmem:[%s1 + $0xa0] sm:$0xff]
  %v40 = vld [vmem:[%s1 + $0xa8] sm:$0xff]
  %v41 = vld [vmem:[%s1 + $0xb0] sm:$0xff]
  %v42 = vld [vmem:[%s1 + $0xb8] sm:$0xff]
  %v43 = vld [vmem:[%s1 + $0xc0] sm:$0xff]
  %v44 = vld [vmem:[%s1 + $0xc8] sm:$0xff]
  %v45 = vld [vmem:[%s1 + $0xd0] sm:$0xff]
  %v46 = vld [vmem:[%s1 + $0xd8] sm:$0xff]
  %v47 = vld [vmem:[%s1 + $0xe0] sm:$0xff]
  %v48 = vld [vmem:[%s1 + $0xe8] sm:$0xff]
  %v49 = vld [vmem:[%s1 + $0xf0] sm:$0xff]
  %v50 = vld [vmem:[%s1 + $0xf8] sm:$0xff]
  %v51 = vld [vmem:[%s1 + $0x100] sm:$0xff]
  %v52 = vld [vmem:[%s1 + $0x108] sm:$0xff]
  %v53 = vld [vmem:[%s1 + $0x110] sm:$0xff]
  %v54 = vld [vmem:[%s1 + $0x118] sm:$0xff]
  %v55 = vld [vmem:[%s1 + $0x120] sm:$0xff]
  %v56 = vld [vmem:[%s1 + $0x128] sm:$0xff]
  %v57 = vld [vmem:[%s1 + $0x130] sm:$0xff]
  %v58 = vld [vmem:[%s1 + $0x138] sm:$0xff]
  %v59 = vld [vmem:[%s1 + $0x140] sm:$0xff]
  %v60 = vld [vmem:[%s1 + $0x148] sm:$0xff]
  %v61 = vld [vmem:[%s1 + $0x150] sm:$0xff]
  %v62 = vld [vmem:[%s1 + $0x158] sm:$0xff]
  %v63 = vld [vmem:[%s1 + $0x160] sm:$0xff]
  %v64 = vld [vmem:[%s1 + $0x168] sm:$0xff]
  %v65 = vld [vmem:[%s1 + $0x170] sm:$0xff]
  %v66 = vld [vmem:[%s1 + $0x178] sm:$0xff]
  %v67 = vld [vmem:[%s2] sm:$0x7]
  %v68 = vld [vmem:[#allocation2] sm:$0xff]
  %v69 = vld [vmem:[%s0] sm:$0xff]
  %v70 = vld [vmem:[%s0 + $0x8] sm:$0xff]
  %v71 = vld [vmem:[%s0 + $0x10] sm:$0xff]
  %v73 = vperm.slane %v67, 0
  %v74 = vperm.slane %v67, 1
  %v75 = vperm.slane %v67, 2
  %79 = vmatpush.msra.mxu0 %v64
  %80 = vmatpush.msra.mxu0 %v61
  %81 = vmatpush.msra.mxu0 %v58
  %82 = vmatpush.msra.mxu0 %v55
  %83 = vmatpush.msra.mxu0 %v52
  %84 = vmatpush.msra.mxu0 %v49
  %85 = vmatpush.msra.mxu0 %v46
  %86 = vmatpush.msra.mxu0 %v43
  %87 = vmatpush.msra.mxu0 %v40
  %88 = vmatpush.msra.mxu0 %v37
  %89 = vmatpush.msra.mxu0 %v34
  %90 = vmatpush.msra.mxu0 %v31
  %91 = vmatpush.msra.mxu0 %v28
  %92 = vmatpush.msra.mxu0 %v25
  %93 = vmatpush.msra.mxu0 %v22
  %94 = vmatpush.msra.mxu0 %v19
  %95 = vmatmul.f32.gmra.mxu0 %v68
  %v96 = vpop.f32.mrf.mxu0
  %v97 = vadd.f32 %v73, %v96
  %98 = vdwg.mxu0
  %99 = vmatpush.msra.mxu0 %v65
  %100 = vmatpush.msra.mxu0 %v62
  %101 = vmatpush.msra.mxu0 %v59
  %102 = vmatpush.msra.mxu0 %v56
  %103 = vmatpush.msra.mxu0 %v53
  %104 = vmatpush.msra.mxu0 %v50
  %105 = vmatpush.msra.mxu0 %v47
  %106 = vmatpush.msra.mxu0 %v44
  %107 = vmatpush.msra.mxu0 %v41
  %108 = vmatpush.msra.mxu0 %v38
  %109 = vmatpush.msra.mxu0 %v35
  %110 = vmatpush.msra.mxu0 %v32
  %111 = vmatpush.msra.mxu0 %v29
  %112 = vmatpush.msra.mxu0 %v26
  %113 = vmatpush.msra.mxu0 %v23
  %114 = vmatpush.msra.mxu0 %v20
  %115 = vmatmul.f32.gmra.mxu0 %v68
  %v116 = vpop.f32.mrf.mxu0
  %v117 = vadd.f32 %v74, %v116
  %118 = vdwg.mxu0
  %119 = vmatpush.msra.mxu0 %v66
  %120 = vmatpush.msra.mxu0 %v63
  %121 = vmatpush.msra.mxu0 %v60
  %122 = vmatpush.msra.mxu0 %v57
  %123 = vmatpush.msra.mxu0 %v54
  %124 = vmatpush.msra.mxu0 %v51
  %125 = vmatpush.msra.mxu0 %v48
  %126 = vmatpush.msra.mxu0 %v45
  %127 = vmatpush.msra.mxu0 %v42
  %128 = vmatpush.msra.mxu0 %v39
  %129 = vmatpush.msra.mxu0 %v36
  %130 = vmatpush.msra.mxu0 %v33
  %131 = vmatpush.msra.mxu0 %v30
  %132 = vmatpush.msra.mxu0 %v27
  %133 = vmatpush.msra.mxu0 %v24
  %134 = vmatpush.msra.mxu0 %v21
  %135 = vmatmul.f32.gmra.mxu0 %v68
  %v136 = vpop.f32.mrf.mxu0
  %v137 = vadd.f32 %v75, %v136
  %138 = vdwg.mxu0
  %v139 = vadd.f32 %v69, %v97
  %v140 = vxor.u32 %v139, 2147483648
  %v141 = vmul.f32 %v140, 1.442695
  %v142 = vpow.pop %v141
  %v143 = vadd.f32 %v142, 1.0
  %v144 = vrcp.pop %v143
  %v145 = vmul.f32 %v143, %v144
  %v146 = vsub.f32 1.0, %v145
  %v147 = vmul.f32 %v144, %v146
  %v148 = vadd.f32 %v144, %v147
  %vm149 = vweird.f32 %v143
  %vm150 = vweird.f32 %v144
  %vm151 = vmor %vm149, %vm150
  %v152 = vsel %vm151, %v144, %v148
  %v153 = vand.u32 2147483647, %v143
  %vm154 = vcmp.eq.f32.partialorder %v153, 8.507059e+37
  %v155 = vand.u32 %v143, 2147483648
  %v156 = vor.u32 1.1754944e-38, %v155
  %v157 = vsel %vm154, %v156, %v152
  %v158 = vmul.f32 1.0, %v157
  %v159 = vadd.f32 %v70, %v117
  %v160 = vxor.u32 %v159, 2147483648
  %v161 = vmul.f32 %v160, 1.442695
  %v162 = vpow.pop %v161
  %v163 = vadd.f32 %v162, 1.0
  %v164 = vrcp.pop %v163
  %v165 = vmul.f32 %v163, %v164
  %v166 = vsub.f32 1.0, %v165
  %v167 = vmul.f32 %v164, %v166
  %v168 = vadd.f32 %v164, %v167
  %vm169 = vweird.f32 %v163
  %vm170 = vweird.f32 %v164
  %vm171 = vmor %vm169, %vm170
  %v172 = vsel %vm171, %v164, %v168
  %v173 = vand.u32 2147483647, %v163
  %vm174 = vcmp.eq.f32.partialorder %v173, 8.507059e+37
  %v175 = vand.u32 %v163, 2147483648
  %v176 = vor.u32 1.1754944e-38, %v175
  %v177 = vsel %vm174, %v176, %v172
  %v178 = vmul.f32 1.0, %v177
  %v179 = vmul.f32 %v158, %v137
  %v180 = vadd.f32 %v71, %v179
  %v181 = vtanh.pop %v180
  %v182 = vsub.f32 1.0, %v178
  %v183 = vmul.f32 %v182, %v181
  %v184 = vmul.f32 %v178, %v68
  %v185 = vadd.f32 %v183, %v184
  %186 = vst [vmem:[%s3] sm:$0xff] %v185
  %s187 = scalar_lea.vmem %s0, 24
  %v188 = vld [vmem:[%s187] sm:$0xff]
  %v189 = vld [vmem:[%s187 + $0x8] sm:$0xff]
  %v190 = vld [vmem:[%s187 + $0x10] sm:$0xff]
  %191 = vmatpush.msra.mxu0 %v64
  %192 = vmatpush.msra.mxu0 %v61
  %193 = vmatpush.msra.mxu0 %v58
  %194 = vmatpush.msra.mxu0 %v55
  %195 = vmatpush.msra.mxu0 %v52
  %196 = vmatpush.msra.mxu0 %v49
  %197 = vmatpush.msra.mxu0 %v46
  %198 = vmatpush.msra.mxu0 %v43
  %199 = vmatpush.msra.mxu0 %v40
  %200 = vmatpush.msra.mxu0 %v37
  %201 = vmatpush.msra.mxu0 %v34
  %202 = vmatpush.msra.mxu0 %v31
  %203 = vmatpush.msra.mxu0 %v28
  %204 = vmatpush.msra.mxu0 %v25
  %205 = vmatpush.msra.mxu0 %v22
  %206 = vmatpush.msra.mxu0 %v19
  %207 = vmatmul.f32.gmra.mxu0 %v185
  %v208 = vpop.f32.mrf.mxu0
  %v209 = vadd.f32 %v73, %v208
  %210 = vdwg.mxu0
  %211 = vmatpush.msra.mxu0 %v65
  %212 = vmatpush.msra.mxu0 %v62
  %213 = vmatpush.msra.mxu0 %v59
  %214 = vmatpush.msra.mxu0 %v56
  %215 = vmatpush.msra.mxu0 %v53
  %216 = vmatpush.msra.mxu0 %v50
  %217 = vmatpush.msra.mxu0 %v47
  %218 = vmatpush.msra.mxu0 %v44
  %219 = vmatpush.msra.mxu0 %v41
  %220 = vmatpush.msra.mxu0 %v38
  %221 = vmatpush.msra.mxu0 %v35
  %222 = vmatpush.msra.mxu0 %v32
  %223 = vmatpush.msra.mxu0 %v29
  %224 = vmatpush.msra.mxu0 %v26
  %225 = vmatpush.msra.mxu0 %v23
  %226 = vmatpush.msra.mxu0 %v20
  %227 = vmatmul.f32.gmra.mxu0 %v185
  %v228 = vpop.f32.mrf.mxu0
  %v229 = vadd.f32 %v74, %v228
  %230 = vdwg.mxu0
  %231 = vmatpush.msra.mxu0 %v66
  %232 = vmatpush.msra.mxu0 %v63
  %233 = vmatpush.msra.mxu0 %v60
  %234 = vmatpush.msra.mxu0 %v57
  %235 = vmatpush.msra.mxu0 %v54
  %236 = vmatpush.msra.mxu0 %v51
  %237 = vmatpush.msra.mxu0 %v48
  %238 = vmatpush.msra.mxu0 %v45
  %239 = vmatpush.msra.mxu0 %v42
  %240 = vmatpush.msra.mxu0 %v39
  %241 = vmatpush.msra.mxu0 %v36
  %242 = vmatpush.msra.mxu0 %v33
  %243 = vmatpush.msra.mxu0 %v30
  %244 = vmatpush.msra.mxu0 %v27
  %245 = vmatpush.msra.mxu0 %v24
  %246 = vmatpush.msra.mxu0 %v21
  %247 = vmatmul.f32.gmra.mxu0 %v185
  %v248 = vpop.f32.mrf.mxu0
  %v249 = vadd.f32 %v75, %v248
  %250 = vdwg.mxu0
  %v251 = vadd.f32 %v188, %v209
  %v252 = vxor.u32 %v251, 2147483648
  %v253 = vmul.f32 %v252, 1.442695
  %v254 = vpow.pop %v253
  %v255 = vadd.f32 %v254, 1.0
  %v256 = vrcp.pop %v255
  %v257 = vmul.f32 %v255, %v256
  %v258 = vsub.f32 1.0, %v257
  %v259 = vmul.f32 %v256, %v258
  %v260 = vadd.f32 %v256, %v259
  %vm261 = vweird.f32 %v255
  %vm262 = vweird.f32 %v256
  %vm263 = vmor %vm261, %vm262
  %v264 = vsel %vm263, %v256, %v260
  %v265 = vand.u32 2147483647, %v255
  %vm266 = vcmp.eq.f32.partialorder %v265, 8.507059e+37
  %v267 = vand.u32 %v255, 2147483648
  %v268 = vor.u32 1.1754944e-38, %v267
  %v269 = vsel %vm266, %v268, %v264
  %v270 = vmul.f32 1.0, %v269
  %v271 = vadd.f32 %v189, %v229
  %v272 = vxor.u32 %v271, 2147483648
  %v273 = vmul.f32 %v272, 1.442695
  %v274 = vpow.pop %v273
  %v275 = vadd.f32 %v274, 1.0
  %v276 = vrcp.pop %v275
  %v277 = vmul.f32 %v275, %v276
  %v278 = vsub.f32 1.0, %v277
  %v279 = vmul.f32 %v276, %v278
  %v280 = vadd.f32 %v276, %v279
  %vm281 = vweird.f32 %v275
  %vm282 = vweird.f32 %v276
  %vm283 = vmor %vm281, %vm282
  %v284 = vsel %vm283, %v276, %v280
  %v285 = vand.u32 2147483647, %v275
  %vm286 = vcmp.eq.f32.partialorder %v285, 8.507059e+37
  %v287 = vand.u32 %v275, 2147483648
  %v288 = vor.u32 1.1754944e-38, %v287
  %v289 = vsel %vm286, %v288, %v284
  %v290 = vmul.f32 1.0, %v289
  %v291 = vmul.f32 %v270, %v249
  %v292 = vadd.f32 %v190, %v291
  %v293 = vtanh.pop %v292
  %v294 = vsub.f32 1.0, %v290
  %v295 = vmul.f32 %v294, %v293
  %v296 = vmul.f32 %v290, %v185
  %v297 = vadd.f32 %v295, %v296
  %s298 = scalar_lea.vmem %s3, 8
  %299 = vst [vmem:[%s298] sm:$0xff] %v297
  %s300 = scalar_lea.vmem %s0, 48
  %v301 = vld [vmem:[%s300] sm:$0xff]
  %v302 = vld [vmem:[%s300 + $0x8] sm:$0xff]
  %v303 = vld [vmem:[%s300 + $0x10] sm:$0xff]
  %304 = vmatpush.msra.mxu0 %v64
  %305 = vmatpush.msra.mxu0 %v61
  %306 = vmatpush.msra.mxu0 %v58
  %307 = vmatpush.msra.mxu0 %v55
  %308 = vmatpush.msra.mxu0 %v52
  %309 = vmatpush.msra.mxu0 %v49
  %310 = vmatpush.msra.mxu0 %v46
  %311 = vmatpush.msra.mxu0 %v43
  %312 = vmatpush.msra.mxu0 %v40
  %313 = vmatpush.msra.mxu0 %v37
  %314 = vmatpush.msra.mxu0 %v34
  %315 = vmatpush.msra.mxu0 %v31
  %316 = vmatpush.msra.mxu0 %v28
  %317 = vmatpush.msra.mxu0 %v25
  %318 = vmatpush.msra.mxu0 %v22
  %319 = vmatpush.msra.mxu0 %v19
  %320 = vmatmul.f32.gmra.mxu0 %v297
  %v321 = vpop.f32.mrf.mxu0
  %v322 = vadd.f32 %v73, %v321
  %323 = vdwg.mxu0
  %324 = vmatpush.msra.mxu0 %v65
  %325 = vmatpush.msra.mxu0 %v62
  %326 = vmatpush.msra.mxu0 %v59
  %327 = vmatpush.msra.mxu0 %v56
  %328 = vmatpush.msra.mxu0 %v53
  %329 = vmatpush.msra.mxu0 %v50
  %330 = vmatpush.msra.mxu0 %v47
  %331 = vmatpush.msra.mxu0 %v44
  %332 = vmatpush.msra.mxu0 %v41
  %333 = vmatpush.msra.mxu0 %v38
  %334 = vmatpush.msra.mxu0 %v35
  %335 = vmatpush.msra.mxu0 %v32
  %336 = vmatpush.msra.mxu0 %v29
  %337 = vmatpush.msra.mxu0 %v26
  %338 = vmatpush.msra.mxu0 %v23
  %339 = vmatpush.msra.mxu0 %v20
  %340 = vmatmul.f32.gmra.mxu0 %v297
  %v341 = vpop.f32.mrf.mxu0
  %v342 = vadd.f32 %v74, %v341
  %343 = vdwg.mxu0
  %344 = vmatpush.msra.mxu0 %v66
  %345 = vmatpush.msra.mxu0 %v63
  %346 = vmatpush.msra.mxu0 %v60
  %347 = vmatpush.msra.mxu0 %v57
  %348 = vmatpush.msra.mxu0 %v54
  %349 = vmatpush.msra.mxu0 %v51
  %350 = vmatpush.msra.mxu0 %v48
  %351 = vmatpush.msra.mxu0 %v45
  %352 = vmatpush.msra.mxu0 %v42
  %353 = vmatpush.msra.mxu0 %v39
  %354 = vmatpush.msra.mxu0 %v36
  %355 = vmatpush.msra.mxu0 %v33
  %356 = vmatpush.msra.mxu0 %v30
  %357 = vmatpush.msra.mxu0 %v27
  %358 = vmatpush.msra.mxu0 %v24
  %359 = vmatpush.msra.mxu0 %v21
  %360 = vmatmul.f32.gmra.mxu0 %v297
  %v361 = vpop.f32.mrf.mxu0
  %v362 = vadd.f32 %v75, %v361
  %363 = vdwg.mxu0
  %v364 = vadd.f32 %v301, %v322
  %v365 = vxor.u32 %v364, 2147483648
  %v366 = vmul.f32 %v365, 1.442695
  %v367 = vpow.pop %v366
  %v368 = vadd.f32 %v367, 1.0
  %v369 = vrcp.pop %v368
  %v370 = vmul.f32 %v368, %v369
  %v371 = vsub.f32 1.0, %v370
  %v372 = vmul.f32 %v369, %v371
  %v373 = vadd.f32 %v369, %v372
  %vm374 = vweird.f32 %v368
  %vm375 = vweird.f32 %v369
  %vm376 = vmor %vm374, %vm375
  %v377 = vsel %vm376, %v369, %v373
  %v378 = vand.u32 2147483647, %v368
  %vm379 = vcmp.eq.f32.partialorder %v378, 8.507059e+37
  %v380 = vand.u32 %v368, 2147483648
  %v381 = vor.u32 1.1754944e-38, %v380
  %v382 = vsel %vm379, %v381, %v377
  %v383 = vmul.f32 1.0, %v382
  %v384 = vadd.f32 %v302, %v342
  %v385 = vxor.u32 %v384, 2147483648
  %v386 = vmul.f32 %v385, 1.442695
  %v387 = vpow.pop %v386
  %v388 = vadd.f32 %v387, 1.0
  %v389 = vrcp.pop %v388
  %v390 = vmul.f32 %v388, %v389
  %v391 = vsub.f32 1.0, %v390
  %v392 = vmul.f32 %v389, %v391
  %v393 = vadd.f32 %v389, %v392
  %vm394 = vweird.f32 %v388
  %vm395 = vweird.f32 %v389
  %vm396 = vmor %vm394, %vm395
  %v397 = vsel %vm396, %v389, %v393
  %v398 = vand.u32 2147483647, %v388
  %vm399 = vcmp.eq.f32.partialorder %v398, 8.507059e+37
  %v400 = vand.u32 %v388, 2147483648
  %v401 = vor.u32 1.1754944e-38, %v400
  %v402 = vsel %vm399, %v401, %v397
  %v403 = vmul.f32 1.0, %v402
  %v404 = vmul.f32 %v383, %v362
  %v405 = vadd.f32 %v303, %v404
  %v406 = vtanh.pop %v405
  %v407 = vsub.f32 1.0, %v403
  %v408 = vmul.f32 %v407, %v406
  %v409 = vmul.f32 %v403, %v297
  %v410 = vadd.f32 %v408, %v409
  %s411 = scalar_lea.vmem %s3, 16
  %412 = vst [vmem:[%s411] sm:$0xff] %v410
  %s413 = scalar_lea.vmem %s0, 72
  %v414 = vld [vmem:[%s413] sm:$0xff]
  %v415 = vld [vmem:[%s413 + $0x8] sm:$0xff]
  %v416 = vld [vmem:[%s413 + $0x10] sm:$0xff]
  %417 = vmatpush.msra.mxu0 %v64
  %418 = vmatpush.msra.mxu0 %v61
  %419 = vmatpush.msra.mxu0 %v58
  %420 = vmatpush.msra.mxu0 %v55
  %421 = vmatpush.msra.mxu0 %v52
  %422 = vmatpush.msra.mxu0 %v49
  %423 = vmatpush.msra.mxu0 %v46
  %424 = vmatpush.msra.mxu0 %v43
  %425 = vmatpush.msra.mxu0 %v40
  %426 = vmatpush.msra.mxu0 %v37
  %427 = vmatpush.msra.mxu0 %v34
  %428 = vmatpush.msra.mxu0 %v31
  %429 = vmatpush.msra.mxu0 %v28
  %430 = vmatpush.msra.mxu0 %v25
  %431 = vmatpush.msra.mxu0 %v22
  %432 = vmatpush.msra.mxu0 %v19
  %433 = vmatmul.f32.gmra.mxu0 %v410
  %v434 = vpop.f32.mrf.mxu0
  %v435 = vadd.f32 %v73, %v434
  %436 = vdwg.mxu0
  %437 = vmatpush.msra.mxu0 %v65
  %438 = vmatpush.msra.mxu0 %v62
  %439 = vmatpush.msra.mxu0 %v59
  %440 = vmatpush.msra.mxu0 %v56
  %441 = vmatpush.msra.mxu0 %v53
  %442 = vmatpush.msra.mxu0 %v50
  %443 = vmatpush.msra.mxu0 %v47
  %444 = vmatpush.msra.mxu0 %v44
  %445 = vmatpush.msra.mxu0 %v41
  %446 = vmatpush.msra.mxu0 %v38
  %447 = vmatpush.msra.mxu0 %v35
  %448 = vmatpush.msra.mxu0 %v32
  %449 = vmatpush.msra.mxu0 %v29
  %450 = vmatpush.msra.mxu0 %v26
  %451 = vmatpush.msra.mxu0 %v23
  %452 = vmatpush.msra.mxu0 %v20
  %453 = vmatmul.f32.gmra.mxu0 %v410
  %v454 = vpop.f32.mrf.mxu0
  %v455 = vadd.f32 %v74, %v454
  %456 = vdwg.mxu0
  %457 = vmatpush.msra.mxu0 %v66
  %458 = vmatpush.msra.mxu0 %v63
  %459 = vmatpush.msra.mxu0 %v60
  %460 = vmatpush.msra.mxu0 %v57
  %461 = vmatpush.msra.mxu0 %v54
  %462 = vmatpush.msra.mxu0 %v51
  %463 = vmatpush.msra.mxu0 %v48
  %464 = vmatpush.msra.mxu0 %v45
  %465 = vmatpush.msra.mxu0 %v42
  %466 = vmatpush.msra.mxu0 %v39
  %467 = vmatpush.msra.mxu0 %v36
  %468 = vmatpush.msra.mxu0 %v33
  %469 = vmatpush.msra.mxu0 %v30
  %470 = vmatpush.msra.mxu0 %v27
  %471 = vmatpush.msra.mxu0 %v24
  %472 = vmatpush.msra.mxu0 %v21
  %473 = vmatmul.f32.gmra.mxu0 %v410
  %v474 = vpop.f32.mrf.mxu0
  %v475 = vadd.f32 %v75, %v474
  %476 = vdwg.mxu0
  %v477 = vadd.f32 %v414, %v435
  %v478 = vxor.u32 %v477, 2147483648
  %v479 = vmul.f32 %v478, 1.442695
  %v480 = vpow.pop %v479
  %v481 = vadd.f32 %v480, 1.0
  %v482 = vrcp.pop %v481
  %v483 = vmul.f32 %v481, %v482
  %v484 = vsub.f32 1.0, %v483
  %v485 = vmul.f32 %v482, %v484
  %v486 = vadd.f32 %v482, %v485
  %vm487 = vweird.f32 %v481
  %vm488 = vweird.f32 %v482
  %vm489 = vmor %vm487, %vm488
  %v490 = vsel %vm489, %v482, %v486
  %v491 = vand.u32 2147483647, %v481
  %vm492 = vcmp.eq.f32.partialorder %v491, 8.507059e+37
  %v493 = vand.u32 %v481, 2147483648
  %v494 = vor.u32 1.1754944e-38, %v493
  %v495 = vsel %vm492, %v494, %v490
  %v496 = vmul.f32 1.0, %v495
  %v497 = vadd.f32 %v415, %v455
  %v498 = vxor.u32 %v497, 2147483648
  %v499 = vmul.f32 %v498, 1.442695
  %v500 = vpow.pop %v499
  %v501 = vadd.f32 %v500, 1.0
  %v502 = vrcp.pop %v501
  %v503 = vmul.f32 %v501, %v502
  %v504 = vsub.f32 1.0, %v503
  %v505 = vmul.f32 %v502, %v504
  %v506 = vadd.f32 %v502, %v505
  %vm507 = vweird.f32 %v501
  %vm508 = vweird.f32 %v502
  %vm509 = vmor %vm507, %vm508
  %v510 = vsel %vm509, %v502, %v506
  %v511 = vand.u32 2147483647, %v501
  %vm512 = vcmp.eq.f32.partialorder %v511, 8.507059e+37
  %v513 = vand.u32 %v501, 2147483648
  %v514 = vor.u32 1.1754944e-38, %v513
  %v515 = vsel %vm512, %v514, %v510
  %v516 = vmul.f32 1.0, %v515
  %v517 = vmul.f32 %v496, %v475
  %v518 = vadd.f32 %v416, %v517
  %v519 = vtanh.pop %v518
  %v520 = vsub.f32 1.0, %v516
  %v521 = vmul.f32 %v520, %v519
  %v522 = vmul.f32 %v516, %v410
  %v523 = vadd.f32 %v521, %v522
  %s524 = scalar_lea.vmem %s3, 24
  %525 = vst [vmem:[%s524] sm:$0xff] %v523
  %s526 = scalar_lea.vmem %s0, 96
  %v527 = vld [vmem:[%s526] sm:$0xff]
  %v528 = vld [vmem:[%s526 + $0x8] sm:$0xff]
  %v529 = vld [vmem:[%s526 + $0x10] sm:$0xff]
  %530 = vmatpush.msra.mxu0 %v64
  %531 = vmatpush.msra.mxu0 %v61
  %532 = vmatpush.msra.mxu0 %v58
  %533 = vmatpush.msra.mxu0 %v55
  %534 = vmatpush.msra.mxu0 %v52
  %535 = vmatpush.msra.mxu0 %v49
  %536 = vmatpush.msra.mxu0 %v46
  %537 = vmatpush.msra.mxu0 %v43
  %538 = vmatpush.msra.mxu0 %v40
  %539 = vmatpush.msra.mxu0 %v37
  %540 = vmatpush.msra.mxu0 %v34
  %541 = vmatpush.msra.mxu0 %v31
  %542 = vmatpush.msra.mxu0 %v28
  %543 = vmatpush.msra.mxu0 %v25
  %544 = vmatpush.msra.mxu0 %v22
  %545 = vmatpush.msra.mxu0 %v19
  %546 = vmatmul.f32.gmra.mxu0 %v523
  %v547 = vpop.f32.mrf.mxu0
  %v548 = vadd.f32 %v73, %v547
  %549 = vdwg.mxu0
  %550 = vmatpush.msra.mxu0 %v65
  %551 = vmatpush.msra.mxu0 %v62
  %552 = vmatpush.msra.mxu0 %v59
  %553 = vmatpush.msra.mxu0 %v56
  %554 = vmatpush.msra.mxu0 %v53
  %555 = vmatpush.msra.mxu0 %v50
  %556 = vmatpush.msra.mxu0 %v47
  %557 = vmatpush.msra.mxu0 %v44
  %558 = vmatpush.msra.mxu0 %v41
  %559 = vmatpush.msra.mxu0 %v38
  %560 = vmatpush.msra.mxu0 %v35
  %561 = vmatpush.msra.mxu0 %v32
  %562 = vmatpush.msra.mxu0 %v29
  %563 = vmatpush.msra.mxu0 %v26
  %564 = vmatpush.msra.mxu0 %v23
  %565 = vmatpush.msra.mxu0 %v20
  %566 = vmatmul.f32.gmra.mxu0 %v523
  %v567 = vpop.f32.mrf.mxu0
  %v568 = vadd.f32 %v74, %v567
  %569 = vdwg.mxu0
  %570 = vmatpush.msra.mxu0 %v66
  %571 = vmatpush.msra.mxu0 %v63
  %572 = vmatpush.msra.mxu0 %v60
  %573 = vmatpush.msra.mxu0 %v57
  %574 = vmatpush.msra.mxu0 %v54
  %575 = vmatpush.msra.mxu0 %v51
  %576 = vmatpush.msra.mxu0 %v48
  %577 = vmatpush.msra.mxu0 %v45
  %578 = vmatpush.msra.mxu0 %v42
  %579 = vmatpush.msra.mxu0 %v39
  %580 = vmatpush.msra.mxu0 %v36
  %581 = vmatpush.msra.mxu0 %v33
  %582 = vmatpush.msra.mxu0 %v30
  %583 = vmatpush.msra.mxu0 %v27
  %584 = vmatpush.msra.mxu0 %v24
  %585 = vmatpush.msra.mxu0 %v21
  %586 = vmatmul.f32.gmra.mxu0 %v523
  %v587 = vpop.f32.mrf.mxu0
  %v588 = vadd.f32 %v75, %v587
  %589 = vdwg.mxu0
  %v590 = vadd.f32 %v527, %v548
  %v591 = vxor.u32 %v590, 2147483648
  %v592 = vmul.f32 %v591, 1.442695
  %v593 = vpow.pop %v592
  %v594 = vadd.f32 %v593, 1.0
  %v595 = vrcp.pop %v594
  %v596 = vmul.f32 %v594, %v595
  %v597 = vsub.f32 1.0, %v596
  %v598 = vmul.f32 %v595, %v597
  %v599 = vadd.f32 %v595, %v598
  %vm600 = vweird.f32 %v594
  %vm601 = vweird.f32 %v595
  %vm602 = vmor %vm600, %vm601
  %v603 = vsel %vm602, %v595, %v599
  %v604 = vand.u32 2147483647, %v594
  %vm605 = vcmp.eq.f32.partialorder %v604, 8.507059e+37
  %v606 = vand.u32 %v594, 2147483648
  %v607 = vor.u32 1.1754944e-38, %v606
  %v608 = vsel %vm605, %v607, %v603
  %v609 = vmul.f32 1.0, %v608
  %v610 = vadd.f32 %v528, %v568
  %v611 = vxor.u32 %v610, 2147483648
  %v612 = vmul.f32 %v611, 1.442695
  %v613 = vpow.pop %v612
  %v614 = vadd.f32 %v613, 1.0
  %v615 = vrcp.pop %v614
  %v616 = vmul.f32 %v614, %v615
  %v617 = vsub.f32 1.0, %v616
  %v618 = vmul.f32 %v615, %v617
  %v619 = vadd.f32 %v615, %v618
  %vm620 = vweird.f32 %v614
  %vm621 = vweird.f32 %v615
  %vm622 = vmor %vm620, %vm621
  %v623 = vsel %vm622, %v615, %v619
  %v624 = vand.u32 2147483647, %v614
  %vm625 = vcmp.eq.f32.partialorder %v624, 8.507059e+37
  %v626 = vand.u32 %v614, 2147483648
  %v627 = vor.u32 1.1754944e-38, %v626
  %v628 = vsel %vm625, %v627, %v623
  %v629 = vmul.f32 1.0, %v628
  %v630 = vmul.f32 %v609, %v588
  %v631 = vadd.f32 %v529, %v630
  %v632 = vtanh.pop %v631
  %v633 = vsub.f32 1.0, %v629
  %v634 = vmul.f32 %v633, %v632
  %v635 = vmul.f32 %v629, %v523
  %v636 = vadd.f32 %v634, %v635
  %s637 = scalar_lea.vmem %s3, 32
  %638 = vst [vmem:[%s637] sm:$0xff] %v636
  %s639 = scalar_lea.vmem %s0, 120
  %v640 = vld [vmem:[%s639] sm:$0xff]
  %v641 = vld [vmem:[%s639 + $0x8] sm:$0xff]
  %v642 = vld [vmem:[%s639 + $0x10] sm:$0xff]
  %643 = vmatpush.msra.mxu0 %v64
  %644 = vmatpush.msra.mxu0 %v61
  %645 = vmatpush.msra.mxu0 %v58
  %646 = vmatpush.msra.mxu0 %v55
  %647 = vmatpush.msra.mxu0 %v52
  %648 = vmatpush.msra.mxu0 %v49
  %649 = vmatpush.msra.mxu0 %v46
  %650 = vmatpush.msra.mxu0 %v43
  %651 = vmatpush.msra.mxu0 %v40
  %652 = vmatpush.msra.mxu0 %v37
  %653 = vmatpush.msra.mxu0 %v34
  %654 = vmatpush.msra.mxu0 %v31
  %655 = vmatpush.msra.mxu0 %v28
  %656 = vmatpush.msra.mxu0 %v25
  %657 = vmatpush.msra.mxu0 %v22
  %658 = vmatpush.msra.mxu0 %v19
  %659 = vmatmul.f32.gmra.mxu0 %v636
  %v660 = vpop.f32.mrf.mxu0
  %v661 = vadd.f32 %v73, %v660
  %662 = vdwg.mxu0
  %663 = vmatpush.msra.mxu0 %v65
  %664 = vmatpush.msra.mxu0 %v62
  %665 = vmatpush.msra.mxu0 %v59
  %666 = vmatpush.msra.mxu0 %v56
  %667 = vmatpush.msra.mxu0 %v53
  %668 = vmatpush.msra.mxu0 %v50
  %669 = vmatpush.msra.mxu0 %v47
  %670 = vmatpush.msra.mxu0 %v44
  %671 = vmatpush.msra.mxu0 %v41
  %672 = vmatpush.msra.mxu0 %v38
  %673 = vmatpush.msra.mxu0 %v35
  %674 = vmatpush.msra.mxu0 %v32
  %675 = vmatpush.msra.mxu0 %v29
  %676 = vmatpush.msra.mxu0 %v26
  %677 = vmatpush.msra.mxu0 %v23
  %678 = vmatpush.msra.mxu0 %v20
  %679 = vmatmul.f32.gmra.mxu0 %v636
  %v680 = vpop.f32.mrf.mxu0
  %v681 = vadd.f32 %v74, %v680
  %682 = vdwg.mxu0
  %683 = vmatpush.msra.mxu0 %v66
  %684 = vmatpush.msra.mxu0 %v63
  %685 = vmatpush.msra.mxu0 %v60
  %686 = vmatpush.msra.mxu0 %v57
  %687 = vmatpush.msra.mxu0 %v54
  %688 = vmatpush.msra.mxu0 %v51
  %689 = vmatpush.msra.mxu0 %v48
  %690 = vmatpush.msra.mxu0 %v45
  %691 = vmatpush.msra.mxu0 %v42
  %692 = vmatpush.msra.mxu0 %v39
  %693 = vmatpush.msra.mxu0 %v36
  %694 = vmatpush.msra.mxu0 %v33
  %695 = vmatpush.msra.mxu0 %v30
  %696 = vmatpush.msra.mxu0 %v27
  %697 = vmatpush.msra.mxu0 %v24
  %698 = vmatpush.msra.mxu0 %v21
  %699 = vmatmul.f32.gmra.mxu0 %v636
  %v700 = vpop.f32.mrf.mxu0
  %v701 = vadd.f32 %v75, %v700
  %702 = vdwg.mxu0
  %v703 = vadd.f32 %v640, %v661
  %v704 = vxor.u32 %v703, 2147483648
  %v705 = vmul.f32 %v704, 1.442695
  %v706 = vpow.pop %v705
  %v707 = vadd.f32 %v706, 1.0
  %v708 = vrcp.pop %v707
  %v709 = vmul.f32 %v707, %v708
  %v710 = vsub.f32 1.0, %v709
  %v711 = vmul.f32 %v708, %v710
  %v712 = vadd.f32 %v708, %v711
  %vm713 = vweird.f32 %v707
  %vm714 = vweird.f32 %v708
  %vm715 = vmor %vm713, %vm714
  %v716 = vsel %vm715, %v708, %v712
  %v717 = vand.u32 2147483647, %v707
  %vm718 = vcmp.eq.f32.partialorder %v717, 8.507059e+37
  %v719 = vand.u32 %v707, 2147483648
  %v720 = vor.u32 1.1754944e-38, %v719
  %v721 = vsel %vm718, %v720, %v716
  %v722 = vmul.f32 1.0, %v721
  %v723 = vadd.f32 %v641, %v681
  %v724 = vxor.u32 %v723, 2147483648
  %v725 = vmul.f32 %v724, 1.442695
  %v726 = vpow.pop %v725
  %v727 = vadd.f32 %v726, 1.0
  %v728 = vrcp.pop %v727
  %v729 = vmul.f32 %v727, %v728
  %v730 = vsub.f32 1.0, %v729
  %v731 = vmul.f32 %v728, %v730
  %v732 = vadd.f32 %v728, %v731
  %vm733 = vweird.f32 %v727
  %vm734 = vweird.f32 %v728
  %vm735 = vmor %vm733, %vm734
  %v736 = vsel %vm735, %v728, %v732
  %v737 = vand.u32 2147483647, %v727
  %vm738 = vcmp.eq.f32.partialorder %v737, 8.507059e+37
  %v739 = vand.u32 %v727, 2147483648
  %v740 = vor.u32 1.1754944e-38, %v739
  %v741 = vsel %vm738, %v740, %v736
  %v742 = vmul.f32 1.0, %v741
  %v743 = vmul.f32 %v722, %v701
  %v744 = vadd.f32 %v642, %v743
  %v745 = vtanh.pop %v744
  %v746 = vsub.f32 1.0, %v742
  %v747 = vmul.f32 %v746, %v745
  %v748 = vmul.f32 %v742, %v636
  %v749 = vadd.f32 %v747, %v748
  %s750 = scalar_lea.vmem %s3, 40
  %751 = vst [vmem:[%s750] sm:$0xff] %v749
  %s752 = scalar_lea.vmem %s0, 144
  %v753 = vld [vmem:[%s752] sm:$0xff]
  %v754 = vld [vmem:[%s752 + $0x8] sm:$0xff]
  %v755 = vld [vmem:[%s752 + $0x10] sm:$0xff]
  %756 = vmatpush.msra.mxu0 %v64
  %757 = vmatpush.msra.mxu0 %v61
  %758 = vmatpush.msra.mxu0 %v58
  %759 = vmatpush.msra.mxu0 %v55
  %760 = vmatpush.msra.mxu0 %v52
  %761 = vmatpush.msra.mxu0 %v49
  %762 = vmatpush.msra.mxu0 %v46
  %763 = vmatpush.msra.mxu0 %v43
  %764 = vmatpush.msra.mxu0 %v40
  %765 = vmatpush.msra.mxu0 %v37
  %766 = vmatpush.msra.mxu0 %v34
  %767 = vmatpush.msra.mxu0 %v31
  %768 = vmatpush.msra.mxu0 %v28
  %769 = vmatpush.msra.mxu0 %v25
  %770 = vmatpush.msra.mxu0 %v22
  %771 = vmatpush.msra.mxu0 %v19
  %772 = vmatmul.f32.gmra.mxu0 %v749
  %v773 = vpop.f32.mrf.mxu0
  %v774 = vadd.f32 %v73, %v773
  %775 = vdwg.mxu0
  %776 = vmatpush.msra.mxu0 %v65
  %777 = vmatpush.msra.mxu0 %v62
  %778 = vmatpush.msra.mxu0 %v59
  %779 = vmatpush.msra.mxu0 %v56
  %780 = vmatpush.msra.mxu0 %v53
  %781 = vmatpush.msra.mxu0 %v50
  %782 = vmatpush.msra.mxu0 %v47
  %783 = vmatpush.msra.mxu0 %v44
  %784 = vmatpush.msra.mxu0 %v41
  %785 = vmatpush.msra.mxu0 %v38
  %786 = vmatpush.msra.mxu0 %v35
  %787 = vmatpush.msra.mxu0 %v32
  %788 = vmatpush.msra.mxu0 %v29
  %789 = vmatpush.msra.mxu0 %v26
  %790 = vmatpush.msra.mxu0 %v23
  %791 = vmatpush.msra.mxu0 %v20
  %792 = vmatmul.f32.gmra.mxu0 %v749
  %v793 = vpop.f32.mrf.mxu0
  %v794 = vadd.f32 %v74, %v793
  %795 = vdwg.mxu0
  %796 = vmatpush.msra.mxu0 %v66
  %797 = vmatpush.msra.mxu0 %v63
  %798 = vmatpush.msra.mxu0 %v60
  %799 = vmatpush.msra.mxu0 %v57
  %800 = vmatpush.msra.mxu0 %v54
  %801 = vmatpush.msra.mxu0 %v51
  %802 = vmatpush.msra.mxu0 %v48
  %803 = vmatpush.msra.mxu0 %v45
  %804 = vmatpush.msra.mxu0 %v42
  %805 = vmatpush.msra.mxu0 %v39
  %806 = vmatpush.msra.mxu0 %v36
  %807 = vmatpush.msra.mxu0 %v33
  %808 = vmatpush.msra.mxu0 %v30
  %809 = vmatpush.msra.mxu0 %v27
  %810 = vmatpush.msra.mxu0 %v24
  %811 = vmatpush.msra.mxu0 %v21
  %812 = vmatmul.f32.gmra.mxu0 %v749
  %v813 = vpop.f32.mrf.mxu0
  %v814 = vadd.f32 %v75, %v813
  %815 = vdwg.mxu0
  %v816 = vadd.f32 %v753, %v774
  %v817 = vxor.u32 %v816, 2147483648
  %v818 = vmul.f32 %v817, 1.442695
  %v819 = vpow.pop %v818
  %v820 = vadd.f32 %v819, 1.0
  %v821 = vrcp.pop %v820
  %v822 = vmul.f32 %v820, %v821
  %v823 = vsub.f32 1.0, %v822
  %v824 = vmul.f32 %v821, %v823
  %v825 = vadd.f32 %v821, %v824
  %vm826 = vweird.f32 %v820
  %vm827 = vweird.f32 %v821
  %vm828 = vmor %vm826, %vm827
  %v829 = vsel %vm828, %v821, %v825
  %v830 = vand.u32 2147483647, %v820
  %vm831 = vcmp.eq.f32.partialorder %v830, 8.507059e+37
  %v832 = vand.u32 %v820, 2147483648
  %v833 = vor.u32 1.1754944e-38, %v832
  %v834 = vsel %vm831, %v833, %v829
  %v835 = vmul.f32 1.0, %v834
  %v836 = vadd.f32 %v754, %v794
  %v837 = vxor.u32 %v836, 2147483648
  %v838 = vmul.f32 %v837, 1.442695
  %v839 = vpow.pop %v838
  %v840 = vadd.f32 %v839, 1.0
  %v841 = vrcp.pop %v840
  %v842 = vmul.f32 %v840, %v841
  %v843 = vsub.f32 1.0, %v842
  %v844 = vmul.f32 %v841, %v843
  %v845 = vadd.f32 %v841, %v844
  %vm846 = vweird.f32 %v840
  %vm847 = vweird.f32 %v841
  %vm848 = vmor %vm846, %vm847
  %v849 = vsel %vm848, %v841, %v845
  %v850 = vand.u32 2147483647, %v840
  %vm851 = vcmp.eq.f32.partialorder %v850, 8.507059e+37
  %v852 = vand.u32 %v840, 2147483648
  %v853 = vor.u32 1.1754944e-38, %v852
  %v854 = vsel %vm851, %v853, %v849
  %v855 = vmul.f32 1.0, %v854
  %v856 = vmul.f32 %v835, %v814
  %v857 = vadd.f32 %v755, %v856
  %v858 = vtanh.pop %v857
  %v859 = vsub.f32 1.0, %v855
  %v860 = vmul.f32 %v859, %v858
  %v861 = vmul.f32 %v855, %v749
  %v862 = vadd.f32 %v860, %v861
  %s863 = scalar_lea.vmem %s3, 48
  %864 = vst [vmem:[%s863] sm:$0xff] %v862
  %s865 = scalar_lea.vmem %s0, 168
  %v866 = vld [vmem:[%s865] sm:$0xff]
  %v867 = vld [vmem:[%s865 + $0x8] sm:$0xff]
  %v868 = vld [vmem:[%s865 + $0x10] sm:$0xff]
  %869 = vmatpush.msra.mxu0 %v64
  %870 = vmatpush.msra.mxu0 %v61
  %871 = vmatpush.msra.mxu0 %v58
  %872 = vmatpush.msra.mxu0 %v55
  %873 = vmatpush.msra.mxu0 %v52
  %874 = vmatpush.msra.mxu0 %v49
  %875 = vmatpush.msra.mxu0 %v46
  %876 = vmatpush.msra.mxu0 %v43
  %877 = vmatpush.msra.mxu0 %v40
  %878 = vmatpush.msra.mxu0 %v37
  %879 = vmatpush.msra.mxu0 %v34
  %880 = vmatpush.msra.mxu0 %v31
  %881 = vmatpush.msra.mxu0 %v28
  %882 = vmatpush.msra.mxu0 %v25
  %883 = vmatpush.msra.mxu0 %v22
  %884 = vmatpush.msra.mxu0 %v19
  %885 = vmatmul.f32.gmra.mxu0 %v862
  %v886 = vpop.f32.mrf.mxu0
  %v887 = vadd.f32 %v73, %v886
  %888 = vdwg.mxu0
  %889 = vmatpush.msra.mxu0 %v65
  %890 = vmatpush.msra.mxu0 %v62
  %891 = vmatpush.msra.mxu0 %v59
  %892 = vmatpush.msra.mxu0 %v56
  %893 = vmatpush.msra.mxu0 %v53
  %894 = vmatpush.msra.mxu0 %v50
  %895 = vmatpush.msra.mxu0 %v47
  %896 = vmatpush.msra.mxu0 %v44
  %897 = vmatpush.msra.mxu0 %v41
  %898 = vmatpush.msra.mxu0 %v38
  %899 = vmatpush.msra.mxu0 %v35
  %900 = vmatpush.msra.mxu0 %v32
  %901 = vmatpush.msra.mxu0 %v29
  %902 = vmatpush.msra.mxu0 %v26
  %903 = vmatpush.msra.mxu0 %v23
  %904 = vmatpush.msra.mxu0 %v20
  %905 = vmatmul.f32.gmra.mxu0 %v862
  %v906 = vpop.f32.mrf.mxu0
  %v907 = vadd.f32 %v74, %v906
  %908 = vdwg.mxu0
  %909 = vmatpush.msra.mxu0 %v66
  %910 = vmatpush.msra.mxu0 %v63
  %911 = vmatpush.msra.mxu0 %v60
  %912 = vmatpush.msra.mxu0 %v57
  %913 = vmatpush.msra.mxu0 %v54
  %914 = vmatpush.msra.mxu0 %v51
  %915 = vmatpush.msra.mxu0 %v48
  %916 = vmatpush.msra.mxu0 %v45
  %917 = vmatpush.msra.mxu0 %v42
  %918 = vmatpush.msra.mxu0 %v39
  %919 = vmatpush.msra.mxu0 %v36
  %920 = vmatpush.msra.mxu0 %v33
  %921 = vmatpush.msra.mxu0 %v30
  %922 = vmatpush.msra.mxu0 %v27
  %923 = vmatpush.msra.mxu0 %v24
  %924 = vmatpush.msra.mxu0 %v21
  %925 = vmatmul.f32.gmra.mxu0 %v862
  %v926 = vpop.f32.mrf.mxu0
  %v927 = vadd.f32 %v75, %v926
  %928 = vdwg.mxu0
  %v929 = vadd.f32 %v866, %v887
  %v930 = vxor.u32 %v929, 2147483648
  %v931 = vmul.f32 %v930, 1.442695
  %v932 = vpow.pop %v931
  %v933 = vadd.f32 %v932, 1.0
  %v934 = vrcp.pop %v933
  %v935 = vmul.f32 %v933, %v934
  %v936 = vsub.f32 1.0, %v935
  %v937 = vmul.f32 %v934, %v936
  %v938 = vadd.f32 %v934, %v937
  %vm939 = vweird.f32 %v933
  %vm940 = vweird.f32 %v934
  %vm941 = vmor %vm939, %vm940
  %v942 = vsel %vm941, %v934, %v938
  %v943 = vand.u32 2147483647, %v933
  %vm944 = vcmp.eq.f32.partialorder %v943, 8.507059e+37
  %v945 = vand.u32 %v933, 2147483648
  %v946 = vor.u32 1.1754944e-38, %v945
  %v947 = vsel %vm944, %v946, %v942
  %v948 = vmul.f32 1.0, %v947
  %v949 = vadd.f32 %v867, %v907
  %v950 = vxor.u32 %v949, 2147483648
  %v951 = vmul.f32 %v950, 1.442695
  %v952 = vpow.pop %v951
  %v953 = vadd.f32 %v952, 1.0
  %v954 = vrcp.pop %v953
  %v955 = vmul.f32 %v953, %v954
  %v956 = vsub.f32 1.0, %v955
  %v957 = vmul.f32 %v954, %v956
  %v958 = vadd.f32 %v954, %v957
  %vm959 = vweird.f32 %v953
  %vm960 = vweird.f32 %v954
  %vm961 = vmor %vm959, %vm960
  %v962 = vsel %vm961, %v954, %v958
  %v963 = vand.u32 2147483647, %v953
  %vm964 = vcmp.eq.f32.partialorder %v963, 8.507059e+37
  %v965 = vand.u32 %v953, 2147483648
  %v966 = vor.u32 1.1754944e-38, %v965
  %v967 = vsel %vm964, %v966, %v962
  %v968 = vmul.f32 1.0, %v967
  %v969 = vmul.f32 %v948, %v927
  %v970 = vadd.f32 %v868, %v969
  %v971 = vtanh.pop %v970
  %v972 = vsub.f32 1.0, %v968
  %v973 = vmul.f32 %v972, %v971
  %v974 = vmul.f32 %v968, %v862
  %v975 = vadd.f32 %v973, %v974
  %s976 = scalar_lea.vmem %s3, 56
  %977 = vst [vmem:[%s976] sm:$0xff] %v975
  %978 = vst [vmem:[#allocation2] sm:$0xff] %v975
  // Predicated region
  $region18: #{srnn_forward.2} parent=0 // pred_check
    _
  $region19: #{srnn_forward.2} parent=0 // pred_check_branch
    %980 = sbr.rel (0) target = $region21
  $region20: #{srnn_forward.2} parent=0 // pred_region
    _
  $region21: #{srnn_forward.2} parent=0 // pred_fallthru
    _
  // Predicated region
  $region22: #{srnn_forward.2} parent=0 // pred_check
    _
  $region23: #{srnn_forward.2} parent=0 // pred_check_branch
    %982 = sbr.rel (0) target = $region25
  $region24: #{srnn_forward.2} parent=0 // pred_region
    _
  $region25: #{srnn_forward.2} parent=0 // pred_fallthru
    _

</llo_original>
